<compile_context>
chip_gen: v7x
topology: tpu7x:2x2x1
jax: 0.10.0
libtpu: 0.0.40
codegen_flags: <defaults>
</compile_context>

<pallas_src>
import functools

import jax
import jax.numpy as jnp
from jax.experimental import pallas as pl
from jax.experimental.pallas import tpu as pltpu


def _bmm_kernel(x1_ref, x2_ref, o_ref, acc_ref):
    # Batch dim is squeezed: x1_ref (tm, tk), x2_ref (tk, tn), o_ref (tm, tn).
    k = pl.program_id(3)

    @pl.when(k == 0)
    def _():
        acc_ref[...] = jnp.zeros_like(acc_ref)

    acc_ref[...] += jnp.dot(
        x1_ref[...], x2_ref[...], preferred_element_type=jnp.float32
    )

    @pl.when(k == pl.num_programs(3) - 1)
    def _():
        o_ref[...] = acc_ref[...].astype(o_ref.dtype)


def _pick_tile(dim, candidates):
    """Largest candidate that evenly divides dim, else the full dim.

    Candidates are (8,128)-aligned, so either choice satisfies Mosaic's block
    divisibility rule (aligned tile, or block == full array dim)."""
    for t in candidates:
        if dim % t == 0:
            return t
    return dim


@functools.partial(jax.jit, static_argnames=("keep_frac",))
def our_sparse_matmul(x1, x2, keep_frac=0.5):
    """Forward of OurSparseMatMul: batched matmul x1 @ x2.

    keep_frac is accepted for API parity; it only affects the backward-pass
    activation compression in the original module, not the forward output.
    """
    del keep_frac  # forward output is independent of keep_frac
    # TODO(synk): backward-pass sparsification (input2sparse /
    # get_ref_dim_reduced_input) is save-for-backward only; not implemented.

    B, M, K = x1.shape
    B2, K2, N = x2.shape
    assert B == B2 and K == K2, "shape mismatch"

    out_dtype = jnp.promote_types(x1.dtype, x2.dtype)

    # Tile selection: sublane-side tiles need %8, lane-side tiles need %128.
    # tk sits on the lane side of x1 and sublane side of x2, so candidates are
    # multiples of 128 (which covers both); same reasoning for tm / tn.
    tm = _pick_tile(M, (256, 128, 64, 32, 16, 8))
    tn = _pick_tile(N, (256, 128))          # keep the output lane-dense (>=128)
    tk = _pick_tile(K, (512, 256, 128))

    grid = (B, M // tm, N // tn, K // tk)

    itemsize = jnp.dtype(out_dtype).itemsize
    cost = pl.CostEstimate(
        flops=2 * B * M * N * K,
        transcendentals=0,
        bytes_accessed=(x1.size * x1.dtype.itemsize
                        + x2.size * x2.dtype.itemsize
                        + B * M * N * itemsize),
    )

    return pl.pallas_call(
        _bmm_kernel,
        out_shape=jax.ShapeDtypeStruct((B, M, N), out_dtype),
        grid_spec=pltpu.PrefetchScalarGridSpec(
            num_scalar_prefetch=0,
            grid=grid,
            in_specs=[
                pl.BlockSpec((pl.Squeezed(), tm, tk),
                             lambda b, i, j, k: (b, i, k)),
                pl.BlockSpec((pl.Squeezed(), tk, tn),
                             lambda b, i, j, k: (b, k, j)),
            ],
            out_specs=pl.BlockSpec((pl.Squeezed(), tm, tn),
                                   lambda b, i, j, k: (b, i, j)),
            scratch_shapes=[pltpu.VMEM((tm, tn), jnp.float32)],
        ),
        compiler_params=pltpu.CompilerParams(
            dimension_semantics=("parallel", "parallel", "parallel", "arbitrary"),
            vmem_limit_bytes=64 * 1024 * 1024,
        ),
        cost_estimate=cost,
    )(x1, x2)


if __name__ == "__main__":
    # Small but (8,128)-tileable BERT-ish shapes: batch=2, seq(M)=256,
    # hidden(K)=512, out(N)=256.  Exercises the full tiled path
    # (grid = (2, 2, 2, 1) with tm=tn=128, tk=512).
    key = jax.random.PRNGKey(0)
    k1, k2 = jax.random.split(key)
    x1 = jax.random.normal(k1, (2, 256, 512), dtype=jnp.float32)
    x2 = jax.random.normal(k2, (2, 512, 256), dtype=jnp.float32)

    # Module instantiation analogue: keep_frac is a hyperparameter, no weights.
    keep_frac = 0.5

    y = our_sparse_matmul(x1, x2, keep_frac=keep_frac)
    jax.block_until_ready(y)

    # Correctness check against plain JAX reference (torch.matmul semantics).
    y_ref = jnp.matmul(x1, x2)
    assert y.shape == (2, 256, 256)
    assert jnp.allclose(y, y_ref, atol=2e-4, rtol=2e-4)

    print("KERNEL_OK")
</pallas_src>

<mosaic_0001>
module attributes {stable_mosaic.version = 11 : i64} {
  func.func @_bmm_kernel(%arg0: i32, %arg1: i32, %arg2: i32, %arg3: i32, %arg4: memref<1x256x512xf32, #tpu.memory_space<vmem>>, %arg5: memref<1x512x256xf32, #tpu.memory_space<vmem>>, %arg6: memref<1x256x256xf32, #tpu.memory_space<vmem>>, %arg7: memref<256x256xf32, #tpu.memory_space<vmem>>) attributes {dimension_semantics = [#tpu.dimension_semantics<parallel>, #tpu.dimension_semantics<parallel>, #tpu.dimension_semantics<parallel>, #tpu.dimension_semantics<arbitrary>], iteration_bounds = array<i64: 2, 1, 1, 1>, scalar_prefetch = 0 : i64, scratch_operands = 1 : i64, tpu.core_type = #tpu.core_type<tc>, window_params = [{transform_indices = @transform_0, window_bounds = array<i64: 1, 256, 512>}, {transform_indices = @transform_1, window_bounds = array<i64: 1, 512, 256>}, {transform_indices = @transform_2, window_bounds = array<i64: 1, 256, 256>}]} {
    %c0_i32 = arith.constant 0 : i32
    %0 = arith.cmpi eq, %arg3, %c0_i32 : i32
    %1 = arith.extui %0 : i1 to i32
    %c0_i32_0 = arith.constant 0 : i32
    %2 = arith.cmpi ne, %1, %c0_i32_0 : i32
    scf.if %2 {
      %cst_12 = arith.constant 0.000000e+00 : f32
      %14 = vector.broadcast %cst_12 : f32 to vector<256x256xf32>
      %c0_13 = arith.constant 0 : index
      %c0_14 = arith.constant 0 : index
      %15 = vector.load %arg7[%c0_13, %c0_14] : memref<256x256xf32, #tpu.memory_space<vmem>>, vector<256x256xf32>
      tpu.vector_store %arg7[%c0_13, %c0_14], %14 {strides = array<i32>} : memref<256x256xf32, #tpu.memory_space<vmem>>, vector<256x256xf32>,
    } else {
    }
    %c0 = arith.constant 0 : index
    %c0_1 = arith.constant 0 : index
    %3 = vector.load %arg7[%c0, %c0_1] : memref<256x256xf32, #tpu.memory_space<vmem>>, vector<256x256xf32>
    %c0_2 = arith.constant 0 : index
    %c0_3 = arith.constant 0 : index
    %c0_4 = arith.constant 0 : index
    %4 = vector.load %arg4[%c0_2, %c0_3, %c0_4] : memref<1x256x512xf32, #tpu.memory_space<vmem>>, vector<1x256x512xf32>
    %5 = vector.shape_cast %4 : vector<1x256x512xf32> to vector<256x512xf32>
    %c0_5 = arith.constant 0 : index
    %c0_6 = arith.constant 0 : index
    %c0_7 = arith.constant 0 : index
    %6 = vector.load %arg5[%c0_5, %c0_6, %c0_7] : memref<1x512x256xf32, #tpu.memory_space<vmem>>, vector<1x512x256xf32>
    %7 = vector.shape_cast %6 : vector<1x512x256xf32> to vector<512x256xf32>
    %cst = arith.constant dense<0.000000e+00> : vector<256x256xf32>
    %8 = tpu.matmul %5, %7, %cst {dimension_numbers = #tpu.dot_dimension_numbers<[1], [0], [0], [1], [0, 0, 1, 1], [], []>} : vector<256x512xf32>, vector<512x256xf32>, vector<256x256xf32> -> vector<256x256xf32>
    %9 = arith.addf %3, %8 : vector<256x256xf32>
    %c0_8 = arith.constant 0 : index
    %c0_9 = arith.constant 0 : index
    %10 = vector.load %arg7[%c0_8, %c0_9] : memref<256x256xf32, #tpu.memory_space<vmem>>, vector<256x256xf32>
    tpu.vector_store %arg7[%c0_8, %c0_9], %9 {strides = array<i32>} : memref<256x256xf32, #tpu.memory_space<vmem>>, vector<256x256xf32>,
    %c0_i32_10 = arith.constant 0 : i32
    %11 = arith.cmpi eq, %arg3, %c0_i32_10 : i32
    %12 = arith.extui %11 : i1 to i32
    %c0_i32_11 = arith.constant 0 : i32
    %13 = arith.cmpi ne, %12, %c0_i32_11 : i32
    scf.if %13 {
      %c0_12 = arith.constant 0 : index
      %c0_13 = arith.constant 0 : index
      %14 = vector.load %arg7[%c0_12, %c0_13] : memref<256x256xf32, #tpu.memory_space<vmem>>, vector<256x256xf32>
      %c0_14 = arith.constant 0 : index
      %c0_15 = arith.constant 0 : index
      %c0_16 = arith.constant 0 : index
      %15 = vector.load %arg6[%c0_14, %c0_15, %c0_16] : memref<1x256x256xf32, #tpu.memory_space<vmem>>, vector<1x256x256xf32>
      %16 = vector.shape_cast %15 : vector<1x256x256xf32> to vector<256x256xf32>
      %17 = vector.shape_cast %14 : vector<256x256xf32> to vector<1x256x256xf32>
      tpu.vector_store %arg6[%c0_14, %c0_15, %c0_16], %17 {strides = array<i32>} : memref<1x256x256xf32, #tpu.memory_space<vmem>>, vector<1x256x256xf32>,
    } else {
    }
    return
  }
  func.func @transform_0(%arg0: i32, %arg1: i32, %arg2: i32, %arg3: i32) -> (i32, i32, i32) {
    %c0_i32 = arith.constant 0 : i32
    return %arg0, %arg1, %arg3 : i32, i32, i32
  }
  func.func @transform_1(%arg0: i32, %arg1: i32, %arg2: i32, %arg3: i32) -> (i32, i32, i32) {
    %c0_i32 = arith.constant 0 : i32
    return %arg0, %arg3, %arg2 : i32, i32, i32
  }
  func.func @transform_2(%arg0: i32, %arg1: i32, %arg2: i32, %arg3: i32) -> (i32, i32, i32) {
    %c0_i32 = arith.constant 0 : i32
    return %arg0, %arg1, %arg2 : i32, i32, i32
  }
}

</mosaic_0001>

<llo_original>
// kernel: our_sparse_matmul.1
$region0: #{our_sparse_matmul.1}
  #allocation0 [shape = 'u32[]', space=smem, size = 0x4, offset = 0x4, fixed_abs, tag = 'smem constant byte address 0x4 - core index']
  #allocation1 [shape = 'u32[144,128]{1,0:T(1,128)}', space=vmem, size = 0x12000, scoped, tag = 'internal scratch']
  #allocation2 [shape = 'f32[256,256]{1,0:T(8,128)}', space=vmem, size = 0x40000, scoped, tag = 'scratch operand']
  %s0 = inlined_call_operand.hbm [shape: f32[2,256,512], index: 0, kind: input, shape index: {}]
  %s1 = inlined_call_operand.hbm [shape: f32[2,512,256], index: 1, kind: input, shape index: {}]
  %s2 = inlined_call_operand.hbm [shape: f32[2,256,256], index: 2, kind: output, shape index: {}]
  %s3 = sld [smem:[#allocation0]]
  $region57: #{our_sparse_matmul.1} parent=0
    _
  %s5 = ssub.s32 1, %s3
  %s6 = scalar_select 0, %s5, %s3
  $region1: #{our_sparse_matmul.1} parent=0
    #allocation3 [shape = 'u8[1048576]{0}', space=vmem, size = 0x100000, scoped, tag = 'input window, operand 0']
    #allocation4 [shape = 's32[2]{0}', space=sflag, size = 0x8, scoped, tag = 'scoped memory for our_sparse_matmul.1']
    #allocation5 [shape = 's32[2]{0}', space=sflag, size = 0x8, scoped, tag = 'scoped memory for our_sparse_matmul.1']
    #allocation6 [shape = 'u8[1048576]{0}', space=vmem, size = 0x100000, scoped, tag = 'input window, operand 1']
    #allocation7 [shape = 's32[2]{0}', space=sflag, size = 0x8, scoped, tag = 'scoped memory for our_sparse_matmul.1']
    #allocation8 [shape = 'u8[524288]{0}', space=vmem, size = 0x80000, scoped, tag = 'output window, operand 0']
    %7 = vsyncpa [#allocation4], 0
    %s8 = scalar_lea.sflag [#allocation4], 1
    %9 = vsyncpa %s8, 0
    %10 = vsyncpa [#allocation7], 0
    %s11 = scalar_lea.sflag [#allocation7], 1
    %12 = vsyncpa %s11, 0
    %13 = vsyncpa [#allocation5], 0
    %s14 = scalar_lea.sflag [#allocation5], 1
    %15 = vsyncpa %s14, 0
    loop: start=0, step=1, limit=4
    $region2: #{our_sparse_matmul.1} parent=1 // loop_pre_header
      _
    $region3: #{our_sparse_matmul.1} parent=1 // loop_header
      %s17 = sphi 0, %s21
      %p18 = scmp.ge.s32.totalorder %s17, 4
      %s24 = sphi 0, %s50
      %s25 = sphi 0, %s46
      %s26 = sphi 0, %s42
      %s27 = sphi 0, %s38
      %s28 = sphi 0, %s24
      %s29 = sphi 0, %s25
      %s30 = sphi 0, %s26
      %s31 = sphi 0, %s27
      %s32 = sphi 0, %s28
      %s33 = sphi 0, %s29
      %s34 = sphi 0, %s30
      %s35 = sphi 0, %s31
      %s57 = sphi 0, %s59
      %s60 = sphi 0, %s57
      %s61 = sphi 0, %s60
      %s77 = sphi 0, %s61
      %s87 = sphi 0, %s89
      %s90 = sphi 0, %s87
      %s91 = sphi 0, %s90
      %s107 = sphi 0, %s91
      %s117 = sphi 0, %s119
      %s120 = sphi 0, %s117
      %s121 = sphi 0, %s120
      %s137 = sphi 0, %s121
    $region4: #{our_sparse_matmul.1} parent=1 // loop_header_branch
      %20 = sbr.rel (%p18) target = $region8
    $region5: #{our_sparse_matmul.1} parent=1 // loop_body
      %s22 = ssub.s32 %s17, 1
      %s23 = ssub.s32 %s17, 2
      %s36 = sadd.s32 1, %s27
      %p37 = scmp.ge.s32.totalorder %s36, 1
      %s38 = scalar_select %p37, 0, %s36
      %s39 = sadd.s32 1, %s26
      %s40 = scalar_select %p37, %s39, %s26
      %p41 = scmp.ge.s32.totalorder %s40, 1
      %s42 = scalar_select %p41, 0, %s40
      %s43 = sadd.s32 1, %s25
      %s44 = scalar_select %p41, %s43, %s25
      %p45 = scmp.ge.s32.totalorder %s44, 1
      %s46 = scalar_select %p45, 0, %s44
      %s47 = sadd.s32 1, %s24
      %s48 = scalar_select %p45, %s47, %s24
      %p49 = scmp.ge.s32.totalorder %s48, 2
      %s50 = scalar_select %p49, 0, %s48
      %s51 = ssub.s32 %s24, %s50
      %s52 = ssub.s32 %s25, %s46
      %s53 = sor.u32 %s51, %s52
      %s54 = ssub.s32 %s27, %s38
      %s55 = sor.u32 %s53, %s54
      %p56 = scmp.eq.s32.totalorder %s55, 0
      %s58 = sadd.s32 %s57, 1
      %s59 = scalar_select %p56, %s57, %s58
      %p62 = pneg %p56
      %p63 = scmp.eq.s32.totalorder %s17, 1
      %p64 = por %p62, %p63
      %p65 = scmp.ne.s32.totalorder %s57, %s60
      %p66 = scmp.eq.s32.totalorder %s17, 0
      %p67 = por %p65, %p66
      %p68 = scmp.ne.s32.totalorder %s57, %s60
      %p69 = scmp.eq.s32.totalorder %s22, 1
      %p70 = por %p68, %p69
      %p71 = scmp.ne.s32.totalorder %s60, %s61
      %p72 = scmp.eq.s32.totalorder %s22, 0
      %p73 = por %p71, %p72
      %p74 = scmp.ne.s32.totalorder %s60, %s61
      %p75 = scmp.eq.s32.totalorder %s23, 1
      %p76 = por %p74, %p75
      %p78 = scmp.ne.s32.totalorder %s61, %s77
      %p79 = scmp.eq.s32.totalorder %s23, 0
      %p80 = por %p78, %p79
      %s81 = ssub.s32 %s24, %s50
      %s82 = ssub.s32 %s27, %s38
      %s83 = sor.u32 %s81, %s82
      %s84 = ssub.s32 %s26, %s42
      %s85 = sor.u32 %s83, %s84
      %p86 = scmp.eq.s32.totalorder %s85, 0
      %s88 = sadd.s32 %s87, 1
      %s89 = scalar_select %p86, %s87, %s88
      %p92 = pneg %p86
      %p93 = scmp.eq.s32.totalorder %s17, 1
      %p94 = por %p92, %p93
      %p95 = scmp.ne.s32.totalorder %s87, %s90
      %p96 = scmp.eq.s32.totalorder %s17, 0
      %p97 = por %p95, %p96
      %p98 = scmp.ne.s32.totalorder %s87, %s90
      %p99 = scmp.eq.s32.totalorder %s22, 1
      %p100 = por %p98, %p99
      %p101 = scmp.ne.s32.totalorder %s90, %s91
      %p102 = scmp.eq.s32.totalorder %s22, 0
      %p103 = por %p101, %p102
      %p104 = scmp.ne.s32.totalorder %s90, %s91
      %p105 = scmp.eq.s32.totalorder %s23, 1
      %p106 = por %p104, %p105
      %p108 = scmp.ne.s32.totalorder %s91, %s107
      %p109 = scmp.eq.s32.totalorder %s23, 0
      %p110 = por %p108, %p109
      %s111 = ssub.s32 %s24, %s50
      %s112 = ssub.s32 %s25, %s46
      %s113 = sor.u32 %s111, %s112
      %s114 = ssub.s32 %s26, %s42
      %s115 = sor.u32 %s113, %s114
      %p116 = scmp.eq.s32.totalorder %s115, 0
      %s118 = sadd.s32 %s117, 1
      %s119 = scalar_select %p116, %s117, %s118
      %p122 = pneg %p116
      %p123 = scmp.eq.s32.totalorder %s17, 1
      %p124 = por %p122, %p123
      %p125 = scmp.ne.s32.totalorder %s117, %s120
      %p126 = scmp.eq.s32.totalorder %s17, 0
      %p127 = por %p125, %p126
      %p128 = scmp.ne.s32.totalorder %s117, %s120
      %p129 = scmp.eq.s32.totalorder %s22, 1
      %p130 = por %p128, %p129
      %p131 = scmp.ne.s32.totalorder %s120, %s121
      %p132 = scmp.eq.s32.totalorder %s22, 0
      %p133 = por %p131, %p132
      %p134 = scmp.ne.s32.totalorder %s120, %s121
      %p135 = scmp.eq.s32.totalorder %s23, 1
      %p136 = por %p134, %p135
      %p138 = scmp.ne.s32.totalorder %s121, %s137
      %p139 = scmp.eq.s32.totalorder %s23, 0
      %p140 = por %p138, %p139
      %p141 = scmp.le.s32.totalorder 1, %s17
      %p142 = scmp.lt.s32.totalorder %s17, 3
      %p143 = pnand %p141, %p142
      %p144 = pneg %p143
      // Predicated region
      $region9: #{our_sparse_matmul.1} parent=5 // pred_check
        _
      $region10: #{our_sparse_matmul.1} parent=5 // pred_check_branch
        %146 = sbr.rel (%p143) target = $region12
      $region11: #{our_sparse_matmul.1} parent=5 // pred_region
        %s147 = ssub.s32 %s17, 1
      $region12: #{our_sparse_matmul.1} parent=5 // pred_fallthru
        _
      %p148 = scmp.lt.s32.totalorder %s17, 2
      // Predicated region
      $region13: #{our_sparse_matmul.1} parent=5 // pred_check
        %p149 = pneg %p148
      $region14: #{our_sparse_matmul.1} parent=5 // pred_check_branch
        %151 = sbr.rel (%p149) target = $region16
      $region15: #{our_sparse_matmul.1} parent=5 // pred_region
        // Predicated region
        $region17: #{our_sparse_matmul.1} parent=15 // pred_check
          %p152 = pneg %p67
        $region18: #{our_sparse_matmul.1} parent=15 // pred_check_branch
          %154 = sbr.rel (%p152) target = $region20
        $region19: #{our_sparse_matmul.1} parent=15 // pred_region
          %s155 = sand.u32 %s57, 1
          %s156 = scalar_lea.sflag [#allocation4], %s155
          %s157 = sand.u32 %s57, 1
          %s158 = smul.addr %s157, 1024
          %s159 = scalar_lea.vmem [#allocation3], %s158
          %s160 = smul.u32 32, %s25
          %s161 = smul.u32 4, %s27
          %s163 = ssub.s32 16384, 16384
          %164 = vsyncadd %s156, %s163
          %s165 = smul.addr %s160, 4
          %s166 = sadd.s32 %s161, %s165
          %s167 = smul.addr %s24, 128
          %s168 = sadd.s32 %s166, %s167
          %s169 = smul.addr %s168, 128
          %s170 = scalar_lea.hbm %s0, %s169
          %s171 = sshll.u32 %s159, 4
          %s172 = int_to_ptr.vmem [resolvable:$true] %s171
          %177 = dma.hbm_to_vmem [thread:$0]  %s170, 16384, %s172, %s156, 512, 512, 32
        $region20: #{our_sparse_matmul.1} parent=15 // pred_fallthru
          _
        // Predicated region
        $region21: #{our_sparse_matmul.1} parent=15 // pred_check
          %p178 = pneg %p97
        $region22: #{our_sparse_matmul.1} parent=15 // pred_check_branch
          %180 = sbr.rel (%p178) target = $region24
        $region23: #{our_sparse_matmul.1} parent=15 // pred_region
          %s181 = sand.u32 %s87, 1
          %s182 = scalar_lea.sflag [#allocation7], %s181
          %s183 = sand.u32 %s87, 1
          %s184 = smul.addr %s183, 1024
          %s185 = scalar_lea.vmem [#allocation6], %s184
          %s186 = smul.u32 64, %s27
          %s187 = smul.u32 2, %s26
          %s189 = ssub.s32 16384, 16384
          %190 = vsyncadd %s182, %s189
          %s191 = smul.addr %s186, 2
          %s192 = sadd.s32 %s187, %s191
          %s193 = smul.addr %s24, 128
          %s194 = sadd.s32 %s192, %s193
          %s195 = smul.addr %s194, 128
          %s196 = scalar_lea.hbm %s1, %s195
          %s197 = sshll.u32 %s185, 4
          %s198 = int_to_ptr.vmem [resolvable:$true] %s197
          %203 = dma.hbm_to_vmem [thread:$0]  %s196, 16384, %s198, %s182, 256, 256, 16
        $region24: #{our_sparse_matmul.1} parent=15 // pred_fallthru
          _
      $region16: #{our_sparse_matmul.1} parent=5 // pred_fallthru
        _
      %p204 = scmp.le.s32.totalorder 1, %s17
      %p205 = scmp.lt.s32.totalorder %s17, 3
      %p206 = pnand %p204, %p205
      %p207 = pneg %p206
      // Predicated region
      $region25: #{our_sparse_matmul.1} parent=5 // pred_check
        _
      $region26: #{our_sparse_matmul.1} parent=5 // pred_check_branch
        %209 = sbr.rel (%p206) target = $region28
      $region27: #{our_sparse_matmul.1} parent=5 // pred_region
        %s210 = ssub.s32 %s17, 1
        %s211 = sand.u32 %s60, 1
        %s212 = scalar_lea.sflag [#allocation4], %s211
        %s213 = sand.u32 %s60, 1
        %s214 = smul.addr %s213, 1024
        %s215 = scalar_lea.vmem [#allocation3], %s214
        // Predicated region
        $region29: #{our_sparse_matmul.1} parent=27 // pred_check
          %p216 = pneg %p73
        $region30: #{our_sparse_matmul.1} parent=27 // pred_check_branch
          %218 = sbr.rel (%p216) target = $region32
        $region31: #{our_sparse_matmul.1} parent=27 // pred_region
          %219 = dma.done %s212, 16384
        $region32: #{our_sparse_matmul.1} parent=27 // pred_fallthru
          _
        %s220 = sand.u32 %s90, 1
        %s221 = scalar_lea.sflag [#allocation7], %s220
        %s222 = sand.u32 %s90, 1
        %s223 = smul.addr %s222, 1024
        %s224 = scalar_lea.vmem [#allocation6], %s223
        // Predicated region
        $region33: #{our_sparse_matmul.1} parent=27 // pred_check
          %p225 = pneg %p103
        $region34: #{our_sparse_matmul.1} parent=27 // pred_check_branch
          %227 = sbr.rel (%p225) target = $region36
        $region35: #{our_sparse_matmul.1} parent=27 // pred_region
          %228 = dma.done %s221, 16384
        $region36: #{our_sparse_matmul.1} parent=27 // pred_fallthru
          _
        %s229 = sand.u32 %s60, 1
        %s230 = scalar_lea.sflag [#allocation4], %s229
        %s231 = sand.u32 %s60, 1
        %s232 = smul.addr %s231, 1024
        %s233 = scalar_lea.vmem [#allocation3], %s232
        %p234 = pneg %p73
        %p235 = pneg %p70
        %s236 = sand.u32 %s90, 1
        %s237 = scalar_lea.sflag [#allocation7], %s236
        %s238 = sand.u32 %s90, 1
        %s239 = smul.addr %s238, 1024
        %s240 = scalar_lea.vmem [#allocation6], %s239
        %p241 = pneg %p103
        %p242 = pneg %p100
        %p243 = pneg %p133
        %p244 = pneg %p130
        %s245 = sand.u32 %s120, 1
        %s246 = scalar_lea.sflag [#allocation5], %s245
        %s247 = sand.u32 %s120, 1
        %s248 = smul.addr %s247, 512
        %s249 = scalar_lea.vmem [#allocation8], %s248
        %s250 = smul.u32 32, %s29
        %s251 = smul.u32 4, %s31
        %s252 = smul.u32 64, %s31
        %s253 = smul.u32 2, %s30
        %s254 = smul.u32 32, %s29
        %s255 = smul.u32 2, %s30
        %p256 = scmp.eq.s32.totalorder %s31, 0
        // Predicated region
        $region37: #{our_sparse_matmul.1} parent=27 // pred_check
          %p257 = pneg %p256
        $region38: #{our_sparse_matmul.1} parent=27 // pred_check_branch
          %259 = sbr.rel (%p257) target = $region40
        $region39: #{our_sparse_matmul.1} parent=27 // pred_region
          %260 = vst [vmem:[#allocation2] sm:$0xff] 0.0
          %261 = vst [vmem:[#allocation2 + $0x8] sm:$0xff] 0.0
          %262 = vst [vmem:[#allocation2 + $0x10] sm:$0xff] 0.0
          %263 = vst [vmem:[#allocation2 + $0x18] sm:$0xff] 0.0
          %264 = vst [vmem:[#allocation2 + $0x20] sm:$0xff] 0.0
          %265 = vst [vmem:[#allocation2 + $0x28] sm:$0xff] 0.0
          %266 = vst [vmem:[#allocation2 + $0x30] sm:$0xff] 0.0
          %267 = vst [vmem:[#allocation2 + $0x38] sm:$0xff] 0.0
          %268 = vst [vmem:[#allocation2 + $0x40] sm:$0xff] 0.0
          %269 = vst [vmem:[#allocation2 + $0x48] sm:$0xff] 0.0
          %270 = vst [vmem:[#allocation2 + $0x50] sm:$0xff] 0.0
          %271 = vst [vmem:[#allocation2 + $0x58] sm:$0xff] 0.0
          %272 = vst [vmem:[#allocation2 + $0x60] sm:$0xff] 0.0
          %273 = vst [vmem:[#allocation2 + $0x68] sm:$0xff] 0.0
          %274 = vst [vmem:[#allocation2 + $0x70] sm:$0xff] 0.0
          %275 = vst [vmem:[#allocation2 + $0x78] sm:$0xff] 0.0
          %276 = vst [vmem:[#allocation2 + $0x80] sm:$0xff] 0.0
          %277 = vst [vmem:[#allocation2 + $0x88] sm:$0xff] 0.0
          %278 = vst [vmem:[#allocation2 + $0x90] sm:$0xff] 0.0
          %279 = vst [vmem:[#allocation2 + $0x98] sm:$0xff] 0.0
          %280 = vst [vmem:[#allocation2 + $0xa0] sm:$0xff] 0.0
          %281 = vst [vmem:[#allocation2 + $0xa8] sm:$0xff] 0.0
          %282 = vst [vmem:[#allocation2 + $0xb0] sm:$0xff] 0.0
          %283 = vst [vmem:[#allocation2 + $0xb8] sm:$0xff] 0.0
          %284 = vst [vmem:[#allocation2 + $0xc0] sm:$0xff] 0.0
          %285 = vst [vmem:[#allocation2 + $0xc8] sm:$0xff] 0.0
          %286 = vst [vmem:[#allocation2 + $0xd0] sm:$0xff] 0.0
          %287 = vst [vmem:[#allocation2 + $0xd8] sm:$0xff] 0.0
          %288 = vst [vmem:[#allocation2 + $0xe0] sm:$0xff] 0.0
          %289 = vst [vmem:[#allocation2 + $0xe8] sm:$0xff] 0.0
          %290 = vst [vmem:[#allocation2 + $0xf0] sm:$0xff] 0.0
          %291 = vst [vmem:[#allocation2 + $0xf8] sm:$0xff] 0.0
          %292 = vst [vmem:[#allocation2 + $0x100] sm:$0xff] 0.0
          %293 = vst [vmem:[#allocation2 + $0x108] sm:$0xff] 0.0
          %294 = vst [vmem:[#allocation2 + $0x110] sm:$0xff] 0.0
          %295 = vst [vmem:[#allocation2 + $0x118] sm:$0xff] 0.0
          %296 = vst [vmem:[#allocation2 + $0x120] sm:$0xff] 0.0
          %297 = vst [vmem:[#allocation2 + $0x128] sm:$0xff] 0.0
          %298 = vst [vmem:[#allocation2 + $0x130] sm:$0xff] 0.0
          %299 = vst [vmem:[#allocation2 + $0x138] sm:$0xff] 0.0
          %300 = vst [vmem:[#allocation2 + $0x140] sm:$0xff] 0.0
          %301 = vst [vmem:[#allocation2 + $0x148] sm:$0xff] 0.0
          %302 = vst [vmem:[#allocation2 + $0x150] sm:$0xff] 0.0
          %303 = vst [vmem:[#allocation2 + $0x158] sm:$0xff] 0.0
          %304 = vst [vmem:[#allocation2 + $0x160] sm:$0xff] 0.0
          %305 = vst [vmem:[#allocation2 + $0x168] sm:$0xff] 0.0
          %306 = vst [vmem:[#allocation2 + $0x170] sm:$0xff] 0.0
          %307 = vst [vmem:[#allocation2 + $0x178] sm:$0xff] 0.0
          %308 = vst [vmem:[#allocation2 + $0x180] sm:$0xff] 0.0
          %309 = vst [vmem:[#allocation2 + $0x188] sm:$0xff] 0.0
          %310 = vst [vmem:[#allocation2 + $0x190] sm:$0xff] 0.0
          %311 = vst [vmem:[#allocation2 + $0x198] sm:$0xff] 0.0
          %312 = vst [vmem:[#allocation2 + $0x1a0] sm:$0xff] 0.0
          %313 = vst [vmem:[#allocation2 + $0x1a8] sm:$0xff] 0.0
          %314 = vst [vmem:[#allocation2 + $0x1b0] sm:$0xff] 0.0
          %315 = vst [vmem:[#allocation2 + $0x1b8] sm:$0xff] 0.0
          %316 = vst [vmem:[#allocation2 + $0x1c0] sm:$0xff] 0.0
          %317 = vst [vmem:[#allocation2 + $0x1c8] sm:$0xff] 0.0
          %318 = vst [vmem:[#allocation2 + $0x1d0] sm:$0xff] 0.0
          %319 = vst [vmem:[#allocation2 + $0x1d8] sm:$0xff] 0.0
          %320 = vst [vmem:[#allocation2 + $0x1e0] sm:$0xff] 0.0
          %321 = vst [vmem:[#allocation2 + $0x1e8] sm:$0xff] 0.0
          %322 = vst [vmem:[#allocation2 + $0x1f0] sm:$0xff] 0.0
          %323 = vst [vmem:[#allocation2 + $0x1f8] sm:$0xff] 0.0
        $region40: #{our_sparse_matmul.1} parent=27 // pred_fallthru
          _
        %v324 = vld [vmem:[#allocation2] sm:$0xff]
        %v325 = vld [vmem:[#allocation2 + $0x8] sm:$0xff]
        %v326 = vld [vmem:[#allocation2 + $0x10] sm:$0xff]
        %v327 = vld [vmem:[#allocation2 + $0x18] sm:$0xff]
        %v328 = vld [vmem:[#allocation2 + $0x20] sm:$0xff]
        %v329 = vld [vmem:[#allocation2 + $0x28] sm:$0xff]
        %v330 = vld [vmem:[#allocation2 + $0x30] sm:$0xff]
        %v331 = vld [vmem:[#allocation2 + $0x38] sm:$0xff]
        %v332 = vld [vmem:[#allocation2 + $0x40] sm:$0xff]
        %v333 = vld [vmem:[#allocation2 + $0x48] sm:$0xff]
        %v334 = vld [vmem:[#allocation2 + $0x50] sm:$0xff]
        %v335 = vld [vmem:[#allocation2 + $0x58] sm:$0xff]
        %v336 = vld [vmem:[#allocation2 + $0x60] sm:$0xff]
        %v337 = vld [vmem:[#allocation2 + $0x68] sm:$0xff]
        %v338 = vld [vmem:[#allocation2 + $0x70] sm:$0xff]
        %v339 = vld [vmem:[#allocation2 + $0x78] sm:$0xff]
        %v340 = vld [vmem:[#allocation2 + $0x80] sm:$0xff]
        %v341 = vld [vmem:[#allocation2 + $0x88] sm:$0xff]
        %v342 = vld [vmem:[#allocation2 + $0x90] sm:$0xff]
        %v343 = vld [vmem:[#allocation2 + $0x98] sm:$0xff]
        %v344 = vld [vmem:[#allocation2 + $0xa0] sm:$0xff]
        %v345 = vld [vmem:[#allocation2 + $0xa8] sm:$0xff]
        %v346 = vld [vmem:[#allocation2 + $0xb0] sm:$0xff]
        %v347 = vld [vmem:[#allocation2 + $0xb8] sm:$0xff]
        %v348 = vld [vmem:[#allocation2 + $0xc0] sm:$0xff]
        %v349 = vld [vmem:[#allocation2 + $0xc8] sm:$0xff]
        %v350 = vld [vmem:[#allocation2 + $0xd0] sm:$0xff]
        %v351 = vld [vmem:[#allocation2 + $0xd8] sm:$0xff]
        %v352 = vld [vmem:[#allocation2 + $0xe0] sm:$0xff]
        %v353 = vld [vmem:[#allocation2 + $0xe8] sm:$0xff]
        %v354 = vld [vmem:[#allocation2 + $0xf0] sm:$0xff]
        %v355 = vld [vmem:[#allocation2 + $0xf8] sm:$0xff]
        %v356 = vld [vmem:[#allocation2 + $0x100] sm:$0xff]
        %v357 = vld [vmem:[#allocation2 + $0x108] sm:$0xff]
        %v358 = vld [vmem:[#allocation2 + $0x110] sm:$0xff]
        %v359 = vld [vmem:[#allocation2 + $0x118] sm:$0xff]
        %v360 = vld [vmem:[#allocation2 + $0x120] sm:$0xff]
        %v361 = vld [vmem:[#allocation2 + $0x128] sm:$0xff]
        %v362 = vld [vmem:[#allocation2 + $0x130] sm:$0xff]
        %v363 = vld [vmem:[#allocation2 + $0x138] sm:$0xff]
        %v364 = vld [vmem:[#allocation2 + $0x140] sm:$0xff]
        %v365 = vld [vmem:[#allocation2 + $0x148] sm:$0xff]
        %v366 = vld [vmem:[#allocation2 + $0x150] sm:$0xff]
        %v367 = vld [vmem:[#allocation2 + $0x158] sm:$0xff]
        %v368 = vld [vmem:[#allocation2 + $0x160] sm:$0xff]
        %v369 = vld [vmem:[#allocation2 + $0x168] sm:$0xff]
        %v370 = vld [vmem:[#allocation2 + $0x170] sm:$0xff]
        %v371 = vld [vmem:[#allocation2 + $0x178] sm:$0xff]
        %v372 = vld [vmem:[#allocation2 + $0x180] sm:$0xff]
        %v373 = vld [vmem:[#allocation2 + $0x188] sm:$0xff]
        %v374 = vld [vmem:[#allocation2 + $0x190] sm:$0xff]
        %v375 = vld [vmem:[#allocation2 + $0x198] sm:$0xff]
        %v376 = vld [vmem:[#allocation2 + $0x1a0] sm:$0xff]
        %v377 = vld [vmem:[#allocation2 + $0x1a8] sm:$0xff]
        %v378 = vld [vmem:[#allocation2 + $0x1b0] sm:$0xff]
        %v379 = vld [vmem:[#allocation2 + $0x1b8] sm:$0xff]
        %v380 = vld [vmem:[#allocation2 + $0x1c0] sm:$0xff]
        %v381 = vld [vmem:[#allocation2 + $0x1c8] sm:$0xff]
        %v382 = vld [vmem:[#allocation2 + $0x1d0] sm:$0xff]
        %v383 = vld [vmem:[#allocation2 + $0x1d8] sm:$0xff]
        %v384 = vld [vmem:[#allocation2 + $0x1e0] sm:$0xff]
        %v385 = vld [vmem:[#allocation2 + $0x1e8] sm:$0xff]
        %v386 = vld [vmem:[#allocation2 + $0x1f0] sm:$0xff]
        %v387 = vld [vmem:[#allocation2 + $0x1f8] sm:$0xff]
        %v388 = vld [vmem:[%s215] sm:$0xff]
        %v389 = vld [vmem:[%s215 + $0x8] sm:$0xff]
        %v390 = vld [vmem:[%s215 + $0x10] sm:$0xff]
        %v391 = vld [vmem:[%s215 + $0x18] sm:$0xff]
        %v392 = vld [vmem:[%s215 + $0x20] sm:$0xff]
        %v393 = vld [vmem:[%s215 + $0x28] sm:$0xff]
        %v394 = vld [vmem:[%s215 + $0x30] sm:$0xff]
        %v395 = vld [vmem:[%s215 + $0x38] sm:$0xff]
        %v396 = vld [vmem:[%s215 + $0x40] sm:$0xff]
        %v397 = vld [vmem:[%s215 + $0x48] sm:$0xff]
        %v398 = vld [vmem:[%s215 + $0x50] sm:$0xff]
        %v399 = vld [vmem:[%s215 + $0x58] sm:$0xff]
        %v400 = vld [vmem:[%s215 + $0x60] sm:$0xff]
        %v401 = vld [vmem:[%s215 + $0x68] sm:$0xff]
        %v402 = vld [vmem:[%s215 + $0x70] sm:$0xff]
        %v403 = vld [vmem:[%s215 + $0x78] sm:$0xff]
        %v404 = vld [vmem:[%s215 + $0x80] sm:$0xff]
        %v405 = vld [vmem:[%s215 + $0x88] sm:$0xff]
        %v406 = vld [vmem:[%s215 + $0x90] sm:$0xff]
        %v407 = vld [vmem:[%s215 + $0x98] sm:$0xff]
        %v408 = vld [vmem:[%s215 + $0xa0] sm:$0xff]
        %v409 = vld [vmem:[%s215 + $0xa8] sm:$0xff]
        %v410 = vld [vmem:[%s215 + $0xb0] sm:$0xff]
        %v411 = vld [vmem:[%s215 + $0xb8] sm:$0xff]
        %v412 = vld [vmem:[%s215 + $0xc0] sm:$0xff]
        %v413 = vld [vmem:[%s215 + $0xc8] sm:$0xff]
        %v414 = vld [vmem:[%s215 + $0xd0] sm:$0xff]
        %v415 = vld [vmem:[%s215 + $0xd8] sm:$0xff]
        %v416 = vld [vmem:[%s215 + $0xe0] sm:$0xff]
        %v417 = vld [vmem:[%s215 + $0xe8] sm:$0xff]
        %v418 = vld [vmem:[%s215 + $0xf0] sm:$0xff]
        %v419 = vld [vmem:[%s215 + $0xf8] sm:$0xff]
        %v420 = vld [vmem:[%s215 + $0x100] sm:$0xff]
        %v421 = vld [vmem:[%s215 + $0x108] sm:$0xff]
        %v422 = vld [vmem:[%s215 + $0x110] sm:$0xff]
        %v423 = vld [vmem:[%s215 + $0x118] sm:$0xff]
        %v424 = vld [vmem:[%s215 + $0x120] sm:$0xff]
        %v425 = vld [vmem:[%s215 + $0x128] sm:$0xff]
        %v426 = vld [vmem:[%s215 + $0x130] sm:$0xff]
        %v427 = vld [vmem:[%s215 + $0x138] sm:$0xff]
        %v428 = vld [vmem:[%s215 + $0x140] sm:$0xff]
        %v429 = vld [vmem:[%s215 + $0x148] sm:$0xff]
        %v430 = vld [vmem:[%s215 + $0x150] sm:$0xff]
        %v431 = vld [vmem:[%s215 + $0x158] sm:$0xff]
        %v432 = vld [vmem:[%s215 + $0x160] sm:$0xff]
        %v433 = vld [vmem:[%s215 + $0x168] sm:$0xff]
        %v434 = vld [vmem:[%s215 + $0x170] sm:$0xff]
        %v435 = vld [vmem:[%s215 + $0x178] sm:$0xff]
        %v436 = vld [vmem:[%s215 + $0x180] sm:$0xff]
        %v437 = vld [vmem:[%s215 + $0x188] sm:$0xff]
        %v438 = vld [vmem:[%s215 + $0x190] sm:$0xff]
        %v439 = vld [vmem:[%s215 + $0x198] sm:$0xff]
        %v440 = vld [vmem:[%s215 + $0x1a0] sm:$0xff]
        %v441 = vld [vmem:[%s215 + $0x1a8] sm:$0xff]
        %v442 = vld [vmem:[%s215 + $0x1b0] sm:$0xff]
        %v443 = vld [vmem:[%s215 + $0x1b8] sm:$0xff]
        %v444 = vld [vmem:[%s215 + $0x1c0] sm:$0xff]
        %v445 = vld [vmem:[%s215 + $0x1c8] sm:$0xff]
        %v446 = vld [vmem:[%s215 + $0x1d0] sm:$0xff]
        %v447 = vld [vmem:[%s215 + $0x1d8] sm:$0xff]
        %v448 = vld [vmem:[%s215 + $0x1e0] sm:$0xff]
        %v449 = vld [vmem:[%s215 + $0x1e8] sm:$0xff]
        %v450 = vld [vmem:[%s215 + $0x1f0] sm:$0xff]
        %v451 = vld [vmem:[%s215 + $0x1f8] sm:$0xff]
        %v452 = vld [vmem:[%s215 + $0x200] sm:$0xff]
        %v453 = vld [vmem:[%s215 + $0x208] sm:$0xff]
        %v454 = vld [vmem:[%s215 + $0x210] sm:$0xff]
        %v455 = vld [vmem:[%s215 + $0x218] sm:$0xff]
        %v456 = vld [vmem:[%s215 + $0x220] sm:$0xff]
        %v457 = vld [vmem:[%s215 + $0x228] sm:$0xff]
        %v458 = vld [vmem:[%s215 + $0x230] sm:$0xff]
        %v459 = vld [vmem:[%s215 + $0x238] sm:$0xff]
        %v460 = vld [vmem:[%s215 + $0x240] sm:$0xff]
        %v461 = vld [vmem:[%s215 + $0x248] sm:$0xff]
        %v462 = vld [vmem:[%s215 + $0x250] sm:$0xff]
        %v463 = vld [vmem:[%s215 + $0x258] sm:$0xff]
        %v464 = vld [vmem:[%s215 + $0x260] sm:$0xff]
        %v465 = vld [vmem:[%s215 + $0x268] sm:$0xff]
        %v466 = vld [vmem:[%s215 + $0x270] sm:$0xff]
        %v467 = vld [vmem:[%s215 + $0x278] sm:$0xff]
        %v468 = vld [vmem:[%s215 + $0x280] sm:$0xff]
        %v469 = vld [vmem:[%s215 + $0x288] sm:$0xff]
        %v470 = vld [vmem:[%s215 + $0x290] sm:$0xff]
        %v471 = vld [vmem:[%s215 + $0x298] sm:$0xff]
        %v472 = vld [vmem:[%s215 + $0x2a0] sm:$0xff]
        %v473 = vld [vmem:[%s215 + $0x2a8] sm:$0xff]
        %v474 = vld [vmem:[%s215 + $0x2b0] sm:$0xff]
        %v475 = vld [vmem:[%s215 + $0x2b8] sm:$0xff]
        %v476 = vld [vmem:[%s215 + $0x2c0] sm:$0xff]
        %v477 = vld [vmem:[%s215 + $0x2c8] sm:$0xff]
        %v478 = vld [vmem:[%s215 + $0x2d0] sm:$0xff]
        %v479 = vld [vmem:[%s215 + $0x2d8] sm:$0xff]
        %v480 = vld [vmem:[%s215 + $0x2e0] sm:$0xff]
        %v481 = vld [vmem:[%s215 + $0x2e8] sm:$0xff]
        %v482 = vld [vmem:[%s215 + $0x2f0] sm:$0xff]
        %v483 = vld [vmem:[%s215 + $0x2f8] sm:$0xff]
        %v484 = vld [vmem:[%s215 + $0x300] sm:$0xff]
        %v485 = vld [vmem:[%s215 + $0x308] sm:$0xff]
        %v486 = vld [vmem:[%s215 + $0x310] sm:$0xff]
        %v487 = vld [vmem:[%s215 + $0x318] sm:$0xff]
        %v488 = vld [vmem:[%s215 + $0x320] sm:$0xff]
        %v489 = vld [vmem:[%s215 + $0x328] sm:$0xff]
        %v490 = vld [vmem:[%s215 + $0x330] sm:$0xff]
        %v491 = vld [vmem:[%s215 + $0x338] sm:$0xff]
        %v492 = vld [vmem:[%s215 + $0x340] sm:$0xff]
        %v493 = vld [vmem:[%s215 + $0x348] sm:$0xff]
        %v494 = vld [vmem:[%s215 + $0x350] sm:$0xff]
        %v495 = vld [vmem:[%s215 + $0x358] sm:$0xff]
        %v496 = vld [vmem:[%s215 + $0x360] sm:$0xff]
        %v497 = vld [vmem:[%s215 + $0x368] sm:$0xff]
        %v498 = vld [vmem:[%s215 + $0x370] sm:$0xff]
        %v499 = vld [vmem:[%s215 + $0x378] sm:$0xff]
        %v500 = vld [vmem:[%s215 + $0x380] sm:$0xff]
        %v501 = vld [vmem:[%s215 + $0x388] sm:$0xff]
        %v502 = vld [vmem:[%s215 + $0x390] sm:$0xff]
        %v503 = vld [vmem:[%s215 + $0x398] sm:$0xff]
        %v504 = vld [vmem:[%s215 + $0x3a0] sm:$0xff]
        %v505 = vld [vmem:[%s215 + $0x3a8] sm:$0xff]
        %v506 = vld [vmem:[%s215 + $0x3b0] sm:$0xff]
        %v507 = vld [vmem:[%s215 + $0x3b8] sm:$0xff]
        %v508 = vld [vmem:[%s215 + $0x3c0] sm:$0xff]
        %v509 = vld [vmem:[%s215 + $0x3c8] sm:$0xff]
        %v510 = vld [vmem:[%s215 + $0x3d0] sm:$0xff]
        %v511 = vld [vmem:[%s215 + $0x3d8] sm:$0xff]
        %v512 = vld [vmem:[%s215 + $0x3e0] sm:$0xff]
        %v513 = vld [vmem:[%s215 + $0x3e8] sm:$0xff]
        %v514 = vld [vmem:[%s215 + $0x3f0] sm:$0xff]
        %v515 = vld [vmem:[%s215 + $0x3f8] sm:$0xff]
        %v516 = vld [vmem:[%s224] sm:$0xff]
        %v517 = vld [vmem:[%s224 + $0x8] sm:$0xff]
        %v518 = vld [vmem:[%s224 + $0x10] sm:$0xff]
        %v519 = vld [vmem:[%s224 + $0x18] sm:$0xff]
        %v520 = vld [vmem:[%s224 + $0x20] sm:$0xff]
        %v521 = vld [vmem:[%s224 + $0x28] sm:$0xff]
        %v522 = vld [vmem:[%s224 + $0x30] sm:$0xff]
        %v523 = vld [vmem:[%s224 + $0x38] sm:$0xff]
        %v524 = vld [vmem:[%s224 + $0x40] sm:$0xff]
        %v525 = vld [vmem:[%s224 + $0x48] sm:$0xff]
        %v526 = vld [vmem:[%s224 + $0x50] sm:$0xff]
        %v527 = vld [vmem:[%s224 + $0x58] sm:$0xff]
        %v528 = vld [vmem:[%s224 + $0x60] sm:$0xff]
        %v529 = vld [vmem:[%s224 + $0x68] sm:$0xff]
        %v530 = vld [vmem:[%s224 + $0x70] sm:$0xff]
        %v531 = vld [vmem:[%s224 + $0x78] sm:$0xff]
        %v532 = vld [vmem:[%s224 + $0x80] sm:$0xff]
        %v533 = vld [vmem:[%s224 + $0x88] sm:$0xff]
        %v534 = vld [vmem:[%s224 + $0x90] sm:$0xff]
        %v535 = vld [vmem:[%s224 + $0x98] sm:$0xff]
        %v536 = vld [vmem:[%s224 + $0xa0] sm:$0xff]
        %v537 = vld [vmem:[%s224 + $0xa8] sm:$0xff]
        %v538 = vld [vmem:[%s224 + $0xb0] sm:$0xff]
        %v539 = vld [vmem:[%s224 + $0xb8] sm:$0xff]
        %v540 = vld [vmem:[%s224 + $0xc0] sm:$0xff]
        %v541 = vld [vmem:[%s224 + $0xc8] sm:$0xff]
        %v542 = vld [vmem:[%s224 + $0xd0] sm:$0xff]
        %v543 = vld [vmem:[%s224 + $0xd8] sm:$0xff]
        %v544 = vld [vmem:[%s224 + $0xe0] sm:$0xff]
        %v545 = vld [vmem:[%s224 + $0xe8] sm:$0xff]
        %v546 = vld [vmem:[%s224 + $0xf0] sm:$0xff]
        %v547 = vld [vmem:[%s224 + $0xf8] sm:$0xff]
        %v548 = vld [vmem:[%s224 + $0x100] sm:$0xff]
        %v549 = vld [vmem:[%s224 + $0x108] sm:$0xff]
        %v550 = vld [vmem:[%s224 + $0x110] sm:$0xff]
        %v551 = vld [vmem:[%s224 + $0x118] sm:$0xff]
        %v552 = vld [vmem:[%s224 + $0x120] sm:$0xff]
        %v553 = vld [vmem:[%s224 + $0x128] sm:$0xff]
        %v554 = vld [vmem:[%s224 + $0x130] sm:$0xff]
        %v555 = vld [vmem:[%s224 + $0x138] sm:$0xff]
        %v556 = vld [vmem:[%s224 + $0x140] sm:$0xff]
        %v557 = vld [vmem:[%s224 + $0x148] sm:$0xff]
        %v558 = vld [vmem:[%s224 + $0x150] sm:$0xff]
        %v559 = vld [vmem:[%s224 + $0x158] sm:$0xff]
        %v560 = vld [vmem:[%s224 + $0x160] sm:$0xff]
        %v561 = vld [vmem:[%s224 + $0x168] sm:$0xff]
        %v562 = vld [vmem:[%s224 + $0x170] sm:$0xff]
        %v563 = vld [vmem:[%s224 + $0x178] sm:$0xff]
        %v564 = vld [vmem:[%s224 + $0x180] sm:$0xff]
        %v565 = vld [vmem:[%s224 + $0x188] sm:$0xff]
        %v566 = vld [vmem:[%s224 + $0x190] sm:$0xff]
        %v567 = vld [vmem:[%s224 + $0x198] sm:$0xff]
        %v568 = vld [vmem:[%s224 + $0x1a0] sm:$0xff]
        %v569 = vld [vmem:[%s224 + $0x1a8] sm:$0xff]
        %v570 = vld [vmem:[%s224 + $0x1b0] sm:$0xff]
        %v571 = vld [vmem:[%s224 + $0x1b8] sm:$0xff]
        %v572 = vld [vmem:[%s224 + $0x1c0] sm:$0xff]
        %v573 = vld [vmem:[%s224 + $0x1c8] sm:$0xff]
        %v574 = vld [vmem:[%s224 + $0x1d0] sm:$0xff]
        %v575 = vld [vmem:[%s224 + $0x1d8] sm:$0xff]
        %v576 = vld [vmem:[%s224 + $0x1e0] sm:$0xff]
        %v577 = vld [vmem:[%s224 + $0x1e8] sm:$0xff]
        %v578 = vld [vmem:[%s224 + $0x1f0] sm:$0xff]
        %v579 = vld [vmem:[%s224 + $0x1f8] sm:$0xff]
        %v580 = vld [vmem:[%s224 + $0x200] sm:$0xff]
        %v581 = vld [vmem:[%s224 + $0x208] sm:$0xff]
        %v582 = vld [vmem:[%s224 + $0x210] sm:$0xff]
        %v583 = vld [vmem:[%s224 + $0x218] sm:$0xff]
        %v584 = vld [vmem:[%s224 + $0x220] sm:$0xff]
        %v585 = vld [vmem:[%s224 + $0x228] sm:$0xff]
        %v586 = vld [vmem:[%s224 + $0x230] sm:$0xff]
        %v587 = vld [vmem:[%s224 + $0x238] sm:$0xff]
        %v588 = vld [vmem:[%s224 + $0x240] sm:$0xff]
        %v589 = vld [vmem:[%s224 + $0x248] sm:$0xff]
        %v590 = vld [vmem:[%s224 + $0x250] sm:$0xff]
        %v591 = vld [vmem:[%s224 + $0x258] sm:$0xff]
        %v592 = vld [vmem:[%s224 + $0x260] sm:$0xff]
        %v593 = vld [vmem:[%s224 + $0x268] sm:$0xff]
        %v594 = vld [vmem:[%s224 + $0x270] sm:$0xff]
        %v595 = vld [vmem:[%s224 + $0x278] sm:$0xff]
        %v596 = vld [vmem:[%s224 + $0x280] sm:$0xff]
        %v597 = vld [vmem:[%s224 + $0x288] sm:$0xff]
        %v598 = vld [vmem:[%s224 + $0x290] sm:$0xff]
        %v599 = vld [vmem:[%s224 + $0x298] sm:$0xff]
        %v600 = vld [vmem:[%s224 + $0x2a0] sm:$0xff]
        %v601 = vld [vmem:[%s224 + $0x2a8] sm:$0xff]
        %v602 = vld [vmem:[%s224 + $0x2b0] sm:$0xff]
        %v603 = vld [vmem:[%s224 + $0x2b8] sm:$0xff]
        %v604 = vld [vmem:[%s224 + $0x2c0] sm:$0xff]
        %v605 = vld [vmem:[%s224 + $0x2c8] sm:$0xff]
        %v606 = vld [vmem:[%s224 + $0x2d0] sm:$0xff]
        %v607 = vld [vmem:[%s224 + $0x2d8] sm:$0xff]
        %v608 = vld [vmem:[%s224 + $0x2e0] sm:$0xff]
        %v609 = vld [vmem:[%s224 + $0x2e8] sm:$0xff]
        %v610 = vld [vmem:[%s224 + $0x2f0] sm:$0xff]
        %v611 = vld [vmem:[%s224 + $0x2f8] sm:$0xff]
        %v612 = vld [vmem:[%s224 + $0x300] sm:$0xff]
        %v613 = vld [vmem:[%s224 + $0x308] sm:$0xff]
        %v614 = vld [vmem:[%s224 + $0x310] sm:$0xff]
        %v615 = vld [vmem:[%s224 + $0x318] sm:$0xff]
        %v616 = vld [vmem:[%s224 + $0x320] sm:$0xff]
        %v617 = vld [vmem:[%s224 + $0x328] sm:$0xff]
        %v618 = vld [vmem:[%s224 + $0x330] sm:$0xff]
        %v619 = vld [vmem:[%s224 + $0x338] sm:$0xff]
        %v620 = vld [vmem:[%s224 + $0x340] sm:$0xff]
        %v621 = vld [vmem:[%s224 + $0x348] sm:$0xff]
        %v622 = vld [vmem:[%s224 + $0x350] sm:$0xff]
        %v623 = vld [vmem:[%s224 + $0x358] sm:$0xff]
        %v624 = vld [vmem:[%s224 + $0x360] sm:$0xff]
        %v625 = vld [vmem:[%s224 + $0x368] sm:$0xff]
        %v626 = vld [vmem:[%s224 + $0x370] sm:$0xff]
        %v627 = vld [vmem:[%s224 + $0x378] sm:$0xff]
        %v628 = vld [vmem:[%s224 + $0x380] sm:$0xff]
        %v629 = vld [vmem:[%s224 + $0x388] sm:$0xff]
        %v630 = vld [vmem:[%s224 + $0x390] sm:$0xff]
        %v631 = vld [vmem:[%s224 + $0x398] sm:$0xff]
        %v632 = vld [vmem:[%s224 + $0x3a0] sm:$0xff]
        %v633 = vld [vmem:[%s224 + $0x3a8] sm:$0xff]
        %v634 = vld [vmem:[%s224 + $0x3b0] sm:$0xff]
        %v635 = vld [vmem:[%s224 + $0x3b8] sm:$0xff]
        %v636 = vld [vmem:[%s224 + $0x3c0] sm:$0xff]
        %v637 = vld [vmem:[%s224 + $0x3c8] sm:$0xff]
        %v638 = vld [vmem:[%s224 + $0x3d0] sm:$0xff]
        %v639 = vld [vmem:[%s224 + $0x3d8] sm:$0xff]
        %v640 = vld [vmem:[%s224 + $0x3e0] sm:$0xff]
        %v641 = vld [vmem:[%s224 + $0x3e8] sm:$0xff]
        %v642 = vld [vmem:[%s224 + $0x3f0] sm:$0xff]
        %v643 = vld [vmem:[%s224 + $0x3f8] sm:$0xff]
        %644 = vmatprep.subr.mxu0 %v517
        %645 = vmatpush1.msra.mxu0 %v516
        %646 = vmatprep.subr.mxu0 %v519
        %647 = vmatpush1.msra.mxu0 %v518
        %648 = vmatprep.subr.mxu0 %v521
        %649 = vmatpush1.msra.mxu0 %v520
        %650 = vmatprep.subr.mxu0 %v523
        %651 = vmatpush1.msra.mxu0 %v522
        %652 = vmatprep.subr.mxu0 %v525
        %653 = vmatpush1.msra.mxu0 %v524
        %654 = vmatprep.subr.mxu0 %v527
        %655 = vmatpush1.msra.mxu0 %v526
        %656 = vmatprep.subr.mxu0 %v529
        %657 = vmatpush1.msra.mxu0 %v528
        %658 = vmatprep.subr.mxu0 %v531
        %659 = vmatpush1.msra.mxu0 %v530
        %660 = vmatprep.subr.mxu0 %v533
        %661 = vmatpush1.msra.mxu0 %v532
        %662 = vmatprep.subr.mxu0 %v535
        %663 = vmatpush1.msra.mxu0 %v534
        %664 = vmatprep.subr.mxu0 %v537
        %665 = vmatpush1.msra.mxu0 %v536
        %666 = vmatprep.subr.mxu0 %v539
        %667 = vmatpush1.msra.mxu0 %v538
        %668 = vmatprep.subr.mxu0 %v541
        %669 = vmatpush1.msra.mxu0 %v540
        %670 = vmatprep.subr.mxu0 %v543
        %671 = vmatpush1.msra.mxu0 %v542
        %672 = vmatprep.subr.mxu0 %v545
        %673 = vmatpush1.msra.mxu0 %v544
        %674 = vmatprep.subr.mxu0 %v547
        %675 = vmatpush1.msra.mxu0 %v546
        %676 = vmatprep.subr.mxu0 %v549
        %677 = vmatpush1.msra.mxu0 %v548
        %678 = vmatprep.subr.mxu0 %v551
        %679 = vmatpush1.msra.mxu0 %v550
        %680 = vmatprep.subr.mxu0 %v553
        %681 = vmatpush1.msra.mxu0 %v552
        %682 = vmatprep.subr.mxu0 %v555
        %683 = vmatpush1.msra.mxu0 %v554
        %684 = vmatprep.subr.mxu0 %v557
        %685 = vmatpush1.msra.mxu0 %v556
        %686 = vmatprep.subr.mxu0 %v559
        %687 = vmatpush1.msra.mxu0 %v558
        %688 = vmatprep.subr.mxu0 %v561
        %689 = vmatpush1.msra.mxu0 %v560
        %690 = vmatprep.subr.mxu0 %v563
        %691 = vmatpush1.msra.mxu0 %v562
        %692 = vmatprep.subr.mxu0 %v565
        %693 = vmatpush1.msra.mxu0 %v564
        %694 = vmatprep.subr.mxu0 %v567
        %695 = vmatpush1.msra.mxu0 %v566
        %696 = vmatprep.subr.mxu0 %v569
        %697 = vmatpush1.msra.mxu0 %v568
        %698 = vmatprep.subr.mxu0 %v571
        %699 = vmatpush1.msra.mxu0 %v570
        %700 = vmatprep.subr.mxu0 %v573
        %701 = vmatpush1.msra.mxu0 %v572
        %702 = vmatprep.subr.mxu0 %v575
        %703 = vmatpush1.msra.mxu0 %v574
        %704 = vmatprep.subr.mxu0 %v577
        %705 = vmatpush1.msra.mxu0 %v576
        %706 = vmatprep.subr.mxu0 %v579
        %707 = vmatpush1.msra.mxu0 %v578
        %708 = vmatprep.mubr.f32.mxu0 %v389
        %709 = vmatmul.mubr.f32.gmra.mrb[0].mxu0 %v388
        %v710 = vpop.f32.mrb[0].mxu0
        %v711 = vadd.f32 0.0, %v710
        %v712 = vpop.f32.mrb[0].mxu0
        %v713 = vadd.f32 0.0, %v712
        %714 = vmatprep.mubr.f32.mxu0 %v393
        %715 = vmatmul.mubr.f32.gmra.mrb[0].mxu0 %v392
        %v716 = vpop.f32.mrb[0].mxu0
        %v717 = vadd.f32 0.0, %v716
        %v718 = vpop.f32.mrb[0].mxu0
        %v719 = vadd.f32 0.0, %v718
        %720 = vmatprep.mubr.f32.mxu0 %v397
        %721 = vmatmul.mubr.f32.gmra.mrb[0].mxu0 %v396
        %v722 = vpop.f32.mrb[0].mxu0
        %v723 = vadd.f32 0.0, %v722
        %v724 = vpop.f32.mrb[0].mxu0
        %v725 = vadd.f32 0.0, %v724
        %726 = vmatprep.mubr.f32.mxu0 %v401
        %727 = vmatmul.mubr.f32.gmra.mrb[0].mxu0 %v400
        %v728 = vpop.f32.mrb[0].mxu0
        %v729 = vadd.f32 0.0, %v728
        %v730 = vpop.f32.mrb[0].mxu0
        %v731 = vadd.f32 0.0, %v730
        %732 = vmatprep.mubr.f32.mxu0 %v405
        %733 = vmatmul.mubr.f32.gmra.mrb[0].mxu0 %v404
        %v734 = vpop.f32.mrb[0].mxu0
        %v735 = vadd.f32 0.0, %v734
        %v736 = vpop.f32.mrb[0].mxu0
        %v737 = vadd.f32 0.0, %v736
        %738 = vmatprep.mubr.f32.mxu0 %v409
        %739 = vmatmul.mubr.f32.gmra.mrb[0].mxu0 %v408
        %v740 = vpop.f32.mrb[0].mxu0
        %v741 = vadd.f32 0.0, %v740
        %v742 = vpop.f32.mrb[0].mxu0
        %v743 = vadd.f32 0.0, %v742
        %744 = vmatprep.mubr.f32.mxu0 %v413
        %745 = vmatmul.mubr.f32.gmra.mrb[0].mxu0 %v412
        %v746 = vpop.f32.mrb[0].mxu0
        %v747 = vadd.f32 0.0, %v746
        %v748 = vpop.f32.mrb[0].mxu0
        %v749 = vadd.f32 0.0, %v748
        %750 = vmatprep.mubr.f32.mxu0 %v417
        %751 = vmatmul.mubr.f32.gmra.mrb[0].mxu0 %v416
        %v752 = vpop.f32.mrb[0].mxu0
        %v753 = vadd.f32 0.0, %v752
        %v754 = vpop.f32.mrb[0].mxu0
        %v755 = vadd.f32 0.0, %v754
        %756 = vmatprep.mubr.f32.mxu0 %v421
        %757 = vmatmul.mubr.f32.gmra.mrb[0].mxu0 %v420
        %v758 = vpop.f32.mrb[0].mxu0
        %v759 = vadd.f32 0.0, %v758
        %v760 = vpop.f32.mrb[0].mxu0
        %v761 = vadd.f32 0.0, %v760
        %762 = vmatprep.mubr.f32.mxu0 %v425
        %763 = vmatmul.mubr.f32.gmra.mrb[0].mxu0 %v424
        %v764 = vpop.f32.mrb[0].mxu0
        %v765 = vadd.f32 0.0, %v764
        %v766 = vpop.f32.mrb[0].mxu0
        %v767 = vadd.f32 0.0, %v766
        %768 = vmatprep.mubr.f32.mxu0 %v429
        %769 = vmatmul.mubr.f32.gmra.mrb[0].mxu0 %v428
        %v770 = vpop.f32.mrb[0].mxu0
        %v771 = vadd.f32 0.0, %v770
        %v772 = vpop.f32.mrb[0].mxu0
        %v773 = vadd.f32 0.0, %v772
        %774 = vmatprep.mubr.f32.mxu0 %v433
        %775 = vmatmul.mubr.f32.gmra.mrb[0].mxu0 %v432
        %v776 = vpop.f32.mrb[0].mxu0
        %v777 = vadd.f32 0.0, %v776
        %v778 = vpop.f32.mrb[0].mxu0
        %v779 = vadd.f32 0.0, %v778
        %780 = vmatprep.mubr.f32.mxu0 %v437
        %781 = vmatmul.mubr.f32.gmra.mrb[0].mxu0 %v436
        %v782 = vpop.f32.mrb[0].mxu0
        %v783 = vadd.f32 0.0, %v782
        %v784 = vpop.f32.mrb[0].mxu0
        %v785 = vadd.f32 0.0, %v784
        %786 = vmatprep.mubr.f32.mxu0 %v441
        %787 = vmatmul.mubr.f32.gmra.mrb[0].mxu0 %v440
        %v788 = vpop.f32.mrb[0].mxu0
        %v789 = vadd.f32 0.0, %v788
        %v790 = vpop.f32.mrb[0].mxu0
        %v791 = vadd.f32 0.0, %v790
        %792 = vmatprep.mubr.f32.mxu0 %v445
        %793 = vmatmul.mubr.f32.gmra.mrb[0].mxu0 %v444
        %v794 = vpop.f32.mrb[0].mxu0
        %v795 = vadd.f32 0.0, %v794
        %v796 = vpop.f32.mrb[0].mxu0
        %v797 = vadd.f32 0.0, %v796
        %798 = vmatprep.mubr.f32.mxu0 %v449
        %799 = vmatmul.mubr.f32.gmra.mrb[0].mxu0 %v448
        %v800 = vpop.f32.mrb[0].mxu0
        %v801 = vadd.f32 0.0, %v800
        %v802 = vpop.f32.mrb[0].mxu0
        %v803 = vadd.f32 0.0, %v802
        %804 = vmatprep.mubr.f32.mxu0 %v453
        %805 = vmatmul.mubr.f32.gmra.mrb[0].mxu0 %v452
        %v806 = vpop.f32.mrb[0].mxu0
        %v807 = vadd.f32 0.0, %v806
        %v808 = vpop.f32.mrb[0].mxu0
        %v809 = vadd.f32 0.0, %v808
        %810 = vmatprep.mubr.f32.mxu0 %v457
        %811 = vmatmul.mubr.f32.gmra.mrb[0].mxu0 %v456
        %v812 = vpop.f32.mrb[0].mxu0
        %v813 = vadd.f32 0.0, %v812
        %v814 = vpop.f32.mrb[0].mxu0
        %v815 = vadd.f32 0.0, %v814
        %816 = vmatprep.mubr.f32.mxu0 %v461
        %817 = vmatmul.mubr.f32.gmra.mrb[0].mxu0 %v460
        %v818 = vpop.f32.mrb[0].mxu0
        %v819 = vadd.f32 0.0, %v818
        %v820 = vpop.f32.mrb[0].mxu0
        %v821 = vadd.f32 0.0, %v820
        %822 = vmatprep.mubr.f32.mxu0 %v465
        %823 = vmatmul.mubr.f32.gmra.mrb[0].mxu0 %v464
        %v824 = vpop.f32.mrb[0].mxu0
        %v825 = vadd.f32 0.0, %v824
        %v826 = vpop.f32.mrb[0].mxu0
        %v827 = vadd.f32 0.0, %v826
        %828 = vmatprep.mubr.f32.mxu0 %v469
        %829 = vmatmul.mubr.f32.gmra.mrb[0].mxu0 %v468
        %v830 = vpop.f32.mrb[0].mxu0
        %v831 = vadd.f32 0.0, %v830
        %v832 = vpop.f32.mrb[0].mxu0
        %v833 = vadd.f32 0.0, %v832
        %834 = vmatprep.mubr.f32.mxu0 %v473
        %835 = vmatmul.mubr.f32.gmra.mrb[0].mxu0 %v472
        %v836 = vpop.f32.mrb[0].mxu0
        %v837 = vadd.f32 0.0, %v836
        %v838 = vpop.f32.mrb[0].mxu0
        %v839 = vadd.f32 0.0, %v838
        %840 = vmatprep.mubr.f32.mxu0 %v477
        %841 = vmatmul.mubr.f32.gmra.mrb[0].mxu0 %v476
        %v842 = vpop.f32.mrb[0].mxu0
        %v843 = vadd.f32 0.0, %v842
        %v844 = vpop.f32.mrb[0].mxu0
        %v845 = vadd.f32 0.0, %v844
        %846 = vmatprep.mubr.f32.mxu0 %v481
        %847 = vmatmul.mubr.f32.gmra.mrb[0].mxu0 %v480
        %v848 = vpop.f32.mrb[0].mxu0
        %v849 = vadd.f32 0.0, %v848
        %v850 = vpop.f32.mrb[0].mxu0
        %v851 = vadd.f32 0.0, %v850
        %852 = vmatprep.mubr.f32.mxu0 %v485
        %853 = vmatmul.mubr.f32.gmra.mrb[0].mxu0 %v484
        %v854 = vpop.f32.mrb[0].mxu0
        %v855 = vadd.f32 0.0, %v854
        %v856 = vpop.f32.mrb[0].mxu0
        %v857 = vadd.f32 0.0, %v856
        %858 = vmatprep.mubr.f32.mxu0 %v489
        %859 = vmatmul.mubr.f32.gmra.mrb[0].mxu0 %v488
        %v860 = vpop.f32.mrb[0].mxu0
        %v861 = vadd.f32 0.0, %v860
        %v862 = vpop.f32.mrb[0].mxu0
        %v863 = vadd.f32 0.0, %v862
        %864 = vmatprep.mubr.f32.mxu0 %v493
        %865 = vmatmul.mubr.f32.gmra.mrb[0].mxu0 %v492
        %v866 = vpop.f32.mrb[0].mxu0
        %v867 = vadd.f32 0.0, %v866
        %v868 = vpop.f32.mrb[0].mxu0
        %v869 = vadd.f32 0.0, %v868
        %870 = vmatprep.mubr.f32.mxu0 %v497
        %871 = vmatmul.mubr.f32.gmra.mrb[0].mxu0 %v496
        %v872 = vpop.f32.mrb[0].mxu0
        %v873 = vadd.f32 0.0, %v872
        %v874 = vpop.f32.mrb[0].mxu0
        %v875 = vadd.f32 0.0, %v874
        %876 = vmatprep.mubr.f32.mxu0 %v501
        %877 = vmatmul.mubr.f32.gmra.mrb[0].mxu0 %v500
        %v878 = vpop.f32.mrb[0].mxu0
        %v879 = vadd.f32 0.0, %v878
        %v880 = vpop.f32.mrb[0].mxu0
        %v881 = vadd.f32 0.0, %v880
        %882 = vmatprep.mubr.f32.mxu0 %v505
        %883 = vmatmul.mubr.f32.gmra.mrb[0].mxu0 %v504
        %v884 = vpop.f32.mrb[0].mxu0
        %v885 = vadd.f32 0.0, %v884
        %v886 = vpop.f32.mrb[0].mxu0
        %v887 = vadd.f32 0.0, %v886
        %888 = vmatprep.mubr.f32.mxu0 %v509
        %889 = vmatmul.mubr.f32.gmra.mrb[0].mxu0 %v508
        %v890 = vpop.f32.mrb[0].mxu0
        %v891 = vadd.f32 0.0, %v890
        %v892 = vpop.f32.mrb[0].mxu0
        %v893 = vadd.f32 0.0, %v892
        %894 = vmatprep.mubr.f32.mxu0 %v513
        %895 = vmatmul.mubr.f32.gmra.mrb[0].mxu0 %v512
        %v896 = vpop.f32.mrb[0].mxu0
        %v897 = vadd.f32 0.0, %v896
        %v898 = vpop.f32.mrb[0].mxu0
        %v899 = vadd.f32 0.0, %v898
        %900 = vdwg.mxu0
        %901 = vmatprep.subr.mxu0 %v581
        %902 = vmatpush1.msra.mxu0 %v580
        %903 = vmatprep.subr.mxu0 %v583
        %904 = vmatpush1.msra.mxu0 %v582
        %905 = vmatprep.subr.mxu0 %v585
        %906 = vmatpush1.msra.mxu0 %v584
        %907 = vmatprep.subr.mxu0 %v587
        %908 = vmatpush1.msra.mxu0 %v586
        %909 = vmatprep.subr.mxu0 %v589
        %910 = vmatpush1.msra.mxu0 %v588
        %911 = vmatprep.subr.mxu0 %v591
        %912 = vmatpush1.msra.mxu0 %v590
        %913 = vmatprep.subr.mxu0 %v593
        %914 = vmatpush1.msra.mxu0 %v592
        %915 = vmatprep.subr.mxu0 %v595
        %916 = vmatpush1.msra.mxu0 %v594
        %917 = vmatprep.subr.mxu0 %v597
        %918 = vmatpush1.msra.mxu0 %v596
        %919 = vmatprep.subr.mxu0 %v599
        %920 = vmatpush1.msra.mxu0 %v598
        %921 = vmatprep.subr.mxu0 %v601
        %922 = vmatpush1.msra.mxu0 %v600
        %923 = vmatprep.subr.mxu0 %v603
        %924 = vmatpush1.msra.mxu0 %v602
        %925 = vmatprep.subr.mxu0 %v605
        %926 = vmatpush1.msra.mxu0 %v604
        %927 = vmatprep.subr.mxu0 %v607
        %928 = vmatpush1.msra.mxu0 %v606
        %929 = vmatprep.subr.mxu0 %v609
        %930 = vmatpush1.msra.mxu0 %v608
        %931 = vmatprep.subr.mxu0 %v611
        %932 = vmatpush1.msra.mxu0 %v610
        %933 = vmatprep.subr.mxu0 %v613
        %934 = vmatpush1.msra.mxu0 %v612
        %935 = vmatprep.subr.mxu0 %v615
        %936 = vmatpush1.msra.mxu0 %v614
        %937 = vmatprep.subr.mxu0 %v617
        %938 = vmatpush1.msra.mxu0 %v616
        %939 = vmatprep.subr.mxu0 %v619
        %940 = vmatpush1.msra.mxu0 %v618
        %941 = vmatprep.subr.mxu0 %v621
        %942 = vmatpush1.msra.mxu0 %v620
        %943 = vmatprep.subr.mxu0 %v623
        %944 = vmatpush1.msra.mxu0 %v622
        %945 = vmatprep.subr.mxu0 %v625
        %946 = vmatpush1.msra.mxu0 %v624
        %947 = vmatprep.subr.mxu0 %v627
        %948 = vmatpush1.msra.mxu0 %v626
        %949 = vmatprep.subr.mxu0 %v629
        %950 = vmatpush1.msra.mxu0 %v628
        %951 = vmatprep.subr.mxu0 %v631
        %952 = vmatpush1.msra.mxu0 %v630
        %953 = vmatprep.subr.mxu0 %v633
        %954 = vmatpush1.msra.mxu0 %v632
        %955 = vmatprep.subr.mxu0 %v635
        %956 = vmatpush1.msra.mxu0 %v634
        %957 = vmatprep.subr.mxu0 %v637
        %958 = vmatpush1.msra.mxu0 %v636
        %959 = vmatprep.subr.mxu0 %v639
        %960 = vmatpush1.msra.mxu0 %v638
        %961 = vmatprep.subr.mxu0 %v641
        %962 = vmatpush1.msra.mxu0 %v640
        %963 = vmatprep.subr.mxu0 %v643
        %964 = vmatpush1.msra.mxu0 %v642
        %965 = vmatprep.mubr.f32.mxu0 %v391
        %966 = vmatmul.mubr.f32.gmra.mrb[0].mxu0 %v390
        %v967 = vpop.f32.mrb[0].mxu0
        %v968 = vadd.f32 %v711, %v967
        %v969 = vpop.f32.mrb[0].mxu0
        %v970 = vadd.f32 %v713, %v969
        %971 = vmatprep.mubr.f32.mxu0 %v395
        %972 = vmatmul.mubr.f32.gmra.mrb[0].mxu0 %v394
        %v973 = vpop.f32.mrb[0].mxu0
        %v974 = vadd.f32 %v717, %v973
        %v975 = vpop.f32.mrb[0].mxu0
        %v976 = vadd.f32 %v719, %v975
        %977 = vmatprep.mubr.f32.mxu0 %v399
        %978 = vmatmul.mubr.f32.gmra.mrb[0].mxu0 %v398
        %v979 = vpop.f32.mrb[0].mxu0
        %v980 = vadd.f32 %v723, %v979
        %v981 = vpop.f32.mrb[0].mxu0
        %v982 = vadd.f32 %v725, %v981
        %983 = vmatprep.mubr.f32.mxu0 %v403
        %984 = vmatmul.mubr.f32.gmra.mrb[0].mxu0 %v402
        %v985 = vpop.f32.mrb[0].mxu0
        %v986 = vadd.f32 %v729, %v985
        %v987 = vpop.f32.mrb[0].mxu0
        %v988 = vadd.f32 %v731, %v987
        %989 = vmatprep.mubr.f32.mxu0 %v407
        %990 = vmatmul.mubr.f32.gmra.mrb[0].mxu0 %v406
        %v991 = vpop.f32.mrb[0].mxu0
        %v992 = vadd.f32 %v735, %v991
        %v993 = vpop.f32.mrb[0].mxu0
        %v994 = vadd.f32 %v737, %v993
        %995 = vmatprep.mubr.f32.mxu0 %v411
        %996 = vmatmul.mubr.f32.gmra.mrb[0].mxu0 %v410
        %v997 = vpop.f32.mrb[0].mxu0
        %v998 = vadd.f32 %v741, %v997
        %v999 = vpop.f32.mrb[0].mxu0
        %v1000 = vadd.f32 %v743, %v999
        %1001 = vmatprep.mubr.f32.mxu0 %v415
        %1002 = vmatmul.mubr.f32.gmra.mrb[0].mxu0 %v414
        %v1003 = vpop.f32.mrb[0].mxu0
        %v1004 = vadd.f32 %v747, %v1003
        %v1005 = vpop.f32.mrb[0].mxu0
        %v1006 = vadd.f32 %v749, %v1005
        %1007 = vmatprep.mubr.f32.mxu0 %v419
        %1008 = vmatmul.mubr.f32.gmra.mrb[0].mxu0 %v418
        %v1009 = vpop.f32.mrb[0].mxu0
        %v1010 = vadd.f32 %v753, %v1009
        %v1011 = vpop.f32.mrb[0].mxu0
        %v1012 = vadd.f32 %v755, %v1011
        %1013 = vmatprep.mubr.f32.mxu0 %v423
        %1014 = vmatmul.mubr.f32.gmra.mrb[0].mxu0 %v422
        %v1015 = vpop.f32.mrb[0].mxu0
        %v1016 = vadd.f32 %v759, %v1015
        %v1017 = vpop.f32.mrb[0].mxu0
        %v1018 = vadd.f32 %v761, %v1017
        %1019 = vmatprep.mubr.f32.mxu0 %v427
        %1020 = vmatmul.mubr.f32.gmra.mrb[0].mxu0 %v426
        %v1021 = vpop.f32.mrb[0].mxu0
        %v1022 = vadd.f32 %v765, %v1021
        %v1023 = vpop.f32.mrb[0].mxu0
        %v1024 = vadd.f32 %v767, %v1023
        %1025 = vmatprep.mubr.f32.mxu0 %v431
        %1026 = vmatmul.mubr.f32.gmra.mrb[0].mxu0 %v430
        %v1027 = vpop.f32.mrb[0].mxu0
        %v1028 = vadd.f32 %v771, %v1027
        %v1029 = vpop.f32.mrb[0].mxu0
        %v1030 = vadd.f32 %v773, %v1029
        %1031 = vmatprep.mubr.f32.mxu0 %v435
        %1032 = vmatmul.mubr.f32.gmra.mrb[0].mxu0 %v434
        %v1033 = vpop.f32.mrb[0].mxu0
        %v1034 = vadd.f32 %v777, %v1033
        %v1035 = vpop.f32.mrb[0].mxu0
        %v1036 = vadd.f32 %v779, %v1035
        %1037 = vmatprep.mubr.f32.mxu0 %v439
        %1038 = vmatmul.mubr.f32.gmra.mrb[0].mxu0 %v438
        %v1039 = vpop.f32.mrb[0].mxu0
        %v1040 = vadd.f32 %v783, %v1039
        %v1041 = vpop.f32.mrb[0].mxu0
        %v1042 = vadd.f32 %v785, %v1041
        %1043 = vmatprep.mubr.f32.mxu0 %v443
        %1044 = vmatmul.mubr.f32.gmra.mrb[0].mxu0 %v442
        %v1045 = vpop.f32.mrb[0].mxu0
        %v1046 = vadd.f32 %v789, %v1045
        %v1047 = vpop.f32.mrb[0].mxu0
        %v1048 = vadd.f32 %v791, %v1047
        %1049 = vmatprep.mubr.f32.mxu0 %v447
        %1050 = vmatmul.mubr.f32.gmra.mrb[0].mxu0 %v446
        %v1051 = vpop.f32.mrb[0].mxu0
        %v1052 = vadd.f32 %v795, %v1051
        %v1053 = vpop.f32.mrb[0].mxu0
        %v1054 = vadd.f32 %v797, %v1053
        %1055 = vmatprep.mubr.f32.mxu0 %v451
        %1056 = vmatmul.mubr.f32.gmra.mrb[0].mxu0 %v450
        %v1057 = vpop.f32.mrb[0].mxu0
        %v1058 = vadd.f32 %v801, %v1057
        %v1059 = vpop.f32.mrb[0].mxu0
        %v1060 = vadd.f32 %v803, %v1059
        %1061 = vmatprep.mubr.f32.mxu0 %v455
        %1062 = vmatmul.mubr.f32.gmra.mrb[0].mxu0 %v454
        %v1063 = vpop.f32.mrb[0].mxu0
        %v1064 = vadd.f32 %v807, %v1063
        %v1065 = vpop.f32.mrb[0].mxu0
        %v1066 = vadd.f32 %v809, %v1065
        %1067 = vmatprep.mubr.f32.mxu0 %v459
        %1068 = vmatmul.mubr.f32.gmra.mrb[0].mxu0 %v458
        %v1069 = vpop.f32.mrb[0].mxu0
        %v1070 = vadd.f32 %v813, %v1069
        %v1071 = vpop.f32.mrb[0].mxu0
        %v1072 = vadd.f32 %v815, %v1071
        %1073 = vmatprep.mubr.f32.mxu0 %v463
        %1074 = vmatmul.mubr.f32.gmra.mrb[0].mxu0 %v462
        %v1075 = vpop.f32.mrb[0].mxu0
        %v1076 = vadd.f32 %v819, %v1075
        %v1077 = vpop.f32.mrb[0].mxu0
        %v1078 = vadd.f32 %v821, %v1077
        %1079 = vmatprep.mubr.f32.mxu0 %v467
        %1080 = vmatmul.mubr.f32.gmra.mrb[0].mxu0 %v466
        %v1081 = vpop.f32.mrb[0].mxu0
        %v1082 = vadd.f32 %v825, %v1081
        %v1083 = vpop.f32.mrb[0].mxu0
        %v1084 = vadd.f32 %v827, %v1083
        %1085 = vmatprep.mubr.f32.mxu0 %v471
        %1086 = vmatmul.mubr.f32.gmra.mrb[0].mxu0 %v470
        %v1087 = vpop.f32.mrb[0].mxu0
        %v1088 = vadd.f32 %v831, %v1087
        %v1089 = vpop.f32.mrb[0].mxu0
        %v1090 = vadd.f32 %v833, %v1089
        %1091 = vmatprep.mubr.f32.mxu0 %v475
        %1092 = vmatmul.mubr.f32.gmra.mrb[0].mxu0 %v474
        %v1093 = vpop.f32.mrb[0].mxu0
        %v1094 = vadd.f32 %v837, %v1093
        %v1095 = vpop.f32.mrb[0].mxu0
        %v1096 = vadd.f32 %v839, %v1095
        %1097 = vmatprep.mubr.f32.mxu0 %v479
        %1098 = vmatmul.mubr.f32.gmra.mrb[0].mxu0 %v478
        %v1099 = vpop.f32.mrb[0].mxu0
        %v1100 = vadd.f32 %v843, %v1099
        %v1101 = vpop.f32.mrb[0].mxu0
        %v1102 = vadd.f32 %v845, %v1101
        %1103 = vmatprep.mubr.f32.mxu0 %v483
        %1104 = vmatmul.mubr.f32.gmra.mrb[0].mxu0 %v482
        %v1105 = vpop.f32.mrb[0].mxu0
        %v1106 = vadd.f32 %v849, %v1105
        %v1107 = vpop.f32.mrb[0].mxu0
        %v1108 = vadd.f32 %v851, %v1107
        %1109 = vmatprep.mubr.f32.mxu0 %v487
        %1110 = vmatmul.mubr.f32.gmra.mrb[0].mxu0 %v486
        %v1111 = vpop.f32.mrb[0].mxu0
        %v1112 = vadd.f32 %v855, %v1111
        %v1113 = vpop.f32.mrb[0].mxu0
        %v1114 = vadd.f32 %v857, %v1113
        %1115 = vmatprep.mubr.f32.mxu0 %v491
        %1116 = vmatmul.mubr.f32.gmra.mrb[0].mxu0 %v490
        %v1117 = vpop.f32.mrb[0].mxu0
        %v1118 = vadd.f32 %v861, %v1117
        %v1119 = vpop.f32.mrb[0].mxu0
        %v1120 = vadd.f32 %v863, %v1119
        %1121 = vmatprep.mubr.f32.mxu0 %v495
        %1122 = vmatmul.mubr.f32.gmra.mrb[0].mxu0 %v494
        %v1123 = vpop.f32.mrb[0].mxu0
        %v1124 = vadd.f32 %v867, %v1123
        %v1125 = vpop.f32.mrb[0].mxu0
        %v1126 = vadd.f32 %v869, %v1125
        %1127 = vmatprep.mubr.f32.mxu0 %v499
        %1128 = vmatmul.mubr.f32.gmra.mrb[0].mxu0 %v498
        %v1129 = vpop.f32.mrb[0].mxu0
        %v1130 = vadd.f32 %v873, %v1129
        %v1131 = vpop.f32.mrb[0].mxu0
        %v1132 = vadd.f32 %v875, %v1131
        %1133 = vmatprep.mubr.f32.mxu0 %v503
        %1134 = vmatmul.mubr.f32.gmra.mrb[0].mxu0 %v502
        %v1135 = vpop.f32.mrb[0].mxu0
        %v1136 = vadd.f32 %v879, %v1135
        %v1137 = vpop.f32.mrb[0].mxu0
        %v1138 = vadd.f32 %v881, %v1137
        %1139 = vmatprep.mubr.f32.mxu0 %v507
        %1140 = vmatmul.mubr.f32.gmra.mrb[0].mxu0 %v506
        %v1141 = vpop.f32.mrb[0].mxu0
        %v1142 = vadd.f32 %v885, %v1141
        %v1143 = vpop.f32.mrb[0].mxu0
        %v1144 = vadd.f32 %v887, %v1143
        %1145 = vmatprep.mubr.f32.mxu0 %v511
        %1146 = vmatmul.mubr.f32.gmra.mrb[0].mxu0 %v510
        %v1147 = vpop.f32.mrb[0].mxu0
        %v1148 = vadd.f32 %v891, %v1147
        %v1149 = vpop.f32.mrb[0].mxu0
        %v1150 = vadd.f32 %v893, %v1149
        %1151 = vmatprep.mubr.f32.mxu0 %v515
        %1152 = vmatmul.mubr.f32.gmra.mrb[0].mxu0 %v514
        %v1153 = vpop.f32.mrb[0].mxu0
        %v1154 = vadd.f32 %v897, %v1153
        %v1155 = vpop.f32.mrb[0].mxu0
        %v1156 = vadd.f32 %v899, %v1155
        %1157 = vdwg.mxu0
        %v1158 = vadd.f32 %v324, %v968
        %v1159 = vadd.f32 %v325, %v970
        %v1160 = vadd.f32 %v326, %v974
        %v1161 = vadd.f32 %v327, %v976
        %v1162 = vadd.f32 %v328, %v980
        %v1163 = vadd.f32 %v329, %v982
        %v1164 = vadd.f32 %v330, %v986
        %v1165 = vadd.f32 %v331, %v988
        %v1166 = vadd.f32 %v332, %v992
        %v1167 = vadd.f32 %v333, %v994
        %v1168 = vadd.f32 %v334, %v998
        %v1169 = vadd.f32 %v335, %v1000
        %v1170 = vadd.f32 %v336, %v1004
        %v1171 = vadd.f32 %v337, %v1006
        %v1172 = vadd.f32 %v338, %v1010
        %v1173 = vadd.f32 %v339, %v1012
        %v1174 = vadd.f32 %v340, %v1016
        %v1175 = vadd.f32 %v341, %v1018
        %v1176 = vadd.f32 %v342, %v1022
        %v1177 = vadd.f32 %v343, %v1024
        %v1178 = vadd.f32 %v344, %v1028
        %v1179 = vadd.f32 %v345, %v1030
        %v1180 = vadd.f32 %v346, %v1034
        %v1181 = vadd.f32 %v347, %v1036
        %v1182 = vadd.f32 %v348, %v1040
        %v1183 = vadd.f32 %v349, %v1042
        %v1184 = vadd.f32 %v350, %v1046
        %v1185 = vadd.f32 %v351, %v1048
        %v1186 = vadd.f32 %v352, %v1052
        %v1187 = vadd.f32 %v353, %v1054
        %v1188 = vadd.f32 %v354, %v1058
        %v1189 = vadd.f32 %v355, %v1060
        %v1190 = vadd.f32 %v356, %v1064
        %v1191 = vadd.f32 %v357, %v1066
        %v1192 = vadd.f32 %v358, %v1070
        %v1193 = vadd.f32 %v359, %v1072
        %v1194 = vadd.f32 %v360, %v1076
        %v1195 = vadd.f32 %v361, %v1078
        %v1196 = vadd.f32 %v362, %v1082
        %v1197 = vadd.f32 %v363, %v1084
        %v1198 = vadd.f32 %v364, %v1088
        %v1199 = vadd.f32 %v365, %v1090
        %v1200 = vadd.f32 %v366, %v1094
        %v1201 = vadd.f32 %v367, %v1096
        %v1202 = vadd.f32 %v368, %v1100
        %v1203 = vadd.f32 %v369, %v1102
        %v1204 = vadd.f32 %v370, %v1106
        %v1205 = vadd.f32 %v371, %v1108
        %v1206 = vadd.f32 %v372, %v1112
        %v1207 = vadd.f32 %v373, %v1114
        %v1208 = vadd.f32 %v374, %v1118
        %v1209 = vadd.f32 %v375, %v1120
        %v1210 = vadd.f32 %v376, %v1124
        %v1211 = vadd.f32 %v377, %v1126
        %v1212 = vadd.f32 %v378, %v1130
        %v1213 = vadd.f32 %v379, %v1132
        %v1214 = vadd.f32 %v380, %v1136
        %v1215 = vadd.f32 %v381, %v1138
        %v1216 = vadd.f32 %v382, %v1142
        %v1217 = vadd.f32 %v383, %v1144
        %v1218 = vadd.f32 %v384, %v1148
        %v1219 = vadd.f32 %v385, %v1150
        %v1220 = vadd.f32 %v386, %v1154
        %v1221 = vadd.f32 %v387, %v1156
        %1222 = vst [vmem:[#allocation2] sm:$0xff] %v1158
        %1223 = vst [vmem:[#allocation2 + $0x8] sm:$0xff] %v1159
        %1224 = vst [vmem:[#allocation2 + $0x10] sm:$0xff] %v1160
        %1225 = vst [vmem:[#allocation2 + $0x18] sm:$0xff] %v1161
        %1226 = vst [vmem:[#allocation2 + $0x20] sm:$0xff] %v1162
        %1227 = vst [vmem:[#allocation2 + $0x28] sm:$0xff] %v1163
        %1228 = vst [vmem:[#allocation2 + $0x30] sm:$0xff] %v1164
        %1229 = vst [vmem:[#allocation2 + $0x38] sm:$0xff] %v1165
        %1230 = vst [vmem:[#allocation2 + $0x40] sm:$0xff] %v1166
        %1231 = vst [vmem:[#allocation2 + $0x48] sm:$0xff] %v1167
        %1232 = vst [vmem:[#allocation2 + $0x50] sm:$0xff] %v1168
        %1233 = vst [vmem:[#allocation2 + $0x58] sm:$0xff] %v1169
        %1234 = vst [vmem:[#allocation2 + $0x60] sm:$0xff] %v1170
        %1235 = vst [vmem:[#allocation2 + $0x68] sm:$0xff] %v1171
        %1236 = vst [vmem:[#allocation2 + $0x70] sm:$0xff] %v1172
        %1237 = vst [vmem:[#allocation2 + $0x78] sm:$0xff] %v1173
        %1238 = vst [vmem:[#allocation2 + $0x80] sm:$0xff] %v1174
        %1239 = vst [vmem:[#allocation2 + $0x88] sm:$0xff] %v1175
        %1240 = vst [vmem:[#allocation2 + $0x90] sm:$0xff] %v1176
        %1241 = vst [vmem:[#allocation2 + $0x98] sm:$0xff] %v1177
        %1242 = vst [vmem:[#allocation2 + $0xa0] sm:$0xff] %v1178
        %1243 = vst [vmem:[#allocation2 + $0xa8] sm:$0xff] %v1179
        %1244 = vst [vmem:[#allocation2 + $0xb0] sm:$0xff] %v1180
        %1245 = vst [vmem:[#allocation2 + $0xb8] sm:$0xff] %v1181
        %1246 = vst [vmem:[#allocation2 + $0xc0] sm:$0xff] %v1182
        %1247 = vst [vmem:[#allocation2 + $0xc8] sm:$0xff] %v1183
        %1248 = vst [vmem:[#allocation2 + $0xd0] sm:$0xff] %v1184
        %1249 = vst [vmem:[#allocation2 + $0xd8] sm:$0xff] %v1185
        %1250 = vst [vmem:[#allocation2 + $0xe0] sm:$0xff] %v1186
        %1251 = vst [vmem:[#allocation2 + $0xe8] sm:$0xff] %v1187
        %1252 = vst [vmem:[#allocation2 + $0xf0] sm:$0xff] %v1188
        %1253 = vst [vmem:[#allocation2 + $0xf8] sm:$0xff] %v1189
        %1254 = vst [vmem:[#allocation2 + $0x100] sm:$0xff] %v1190
        %1255 = vst [vmem:[#allocation2 + $0x108] sm:$0xff] %v1191
        %1256 = vst [vmem:[#allocation2 + $0x110] sm:$0xff] %v1192
        %1257 = vst [vmem:[#allocation2 + $0x118] sm:$0xff] %v1193
        %1258 = vst [vmem:[#allocation2 + $0x120] sm:$0xff] %v1194
        %1259 = vst [vmem:[#allocation2 + $0x128] sm:$0xff] %v1195
        %1260 = vst [vmem:[#allocation2 + $0x130] sm:$0xff] %v1196
        %1261 = vst [vmem:[#allocation2 + $0x138] sm:$0xff] %v1197
        %1262 = vst [vmem:[#allocation2 + $0x140] sm:$0xff] %v1198
        %1263 = vst [vmem:[#allocation2 + $0x148] sm:$0xff] %v1199
        %1264 = vst [vmem:[#allocation2 + $0x150] sm:$0xff] %v1200
        %1265 = vst [vmem:[#allocation2 + $0x158] sm:$0xff] %v1201
        %1266 = vst [vmem:[#allocation2 + $0x160] sm:$0xff] %v1202
        %1267 = vst [vmem:[#allocation2 + $0x168] sm:$0xff] %v1203
        %1268 = vst [vmem:[#allocation2 + $0x170] sm:$0xff] %v1204
        %1269 = vst [vmem:[#allocation2 + $0x178] sm:$0xff] %v1205
        %1270 = vst [vmem:[#allocation2 + $0x180] sm:$0xff] %v1206
        %1271 = vst [vmem:[#allocation2 + $0x188] sm:$0xff] %v1207
        %1272 = vst [vmem:[#allocation2 + $0x190] sm:$0xff] %v1208
        %1273 = vst [vmem:[#allocation2 + $0x198] sm:$0xff] %v1209
        %1274 = vst [vmem:[#allocation2 + $0x1a0] sm:$0xff] %v1210
        %1275 = vst [vmem:[#allocation2 + $0x1a8] sm:$0xff] %v1211
        %1276 = vst [vmem:[#allocation2 + $0x1b0] sm:$0xff] %v1212
        %1277 = vst [vmem:[#allocation2 + $0x1b8] sm:$0xff] %v1213
        %1278 = vst [vmem:[#allocation2 + $0x1c0] sm:$0xff] %v1214
        %1279 = vst [vmem:[#allocation2 + $0x1c8] sm:$0xff] %v1215
        %1280 = vst [vmem:[#allocation2 + $0x1d0] sm:$0xff] %v1216
        %1281 = vst [vmem:[#allocation2 + $0x1d8] sm:$0xff] %v1217
        %1282 = vst [vmem:[#allocation2 + $0x1e0] sm:$0xff] %v1218
        %1283 = vst [vmem:[#allocation2 + $0x1e8] sm:$0xff] %v1219
        %1284 = vst [vmem:[#allocation2 + $0x1f0] sm:$0xff] %v1220
        %1285 = vst [vmem:[#allocation2 + $0x1f8] sm:$0xff] %v1221
        // Predicated region
        $region41: #{our_sparse_matmul.1} parent=27 // pred_check
          %p1286 = pneg %p256
        $region42: #{our_sparse_matmul.1} parent=27 // pred_check_branch
          %1288 = sbr.rel (%p1286) target = $region44
        $region43: #{our_sparse_matmul.1} parent=27 // pred_region
          %v1289 = vld [vmem:[#allocation2] sm:$0xff]
          %v1290 = vld [vmem:[#allocation2 + $0x8] sm:$0xff]
          %v1291 = vld [vmem:[#allocation2 + $0x10] sm:$0xff]
          %v1292 = vld [vmem:[#allocation2 + $0x18] sm:$0xff]
          %v1293 = vld [vmem:[#allocation2 + $0x20] sm:$0xff]
          %v1294 = vld [vmem:[#allocation2 + $0x28] sm:$0xff]
          %v1295 = vld [vmem:[#allocation2 + $0x30] sm:$0xff]
          %v1296 = vld [vmem:[#allocation2 + $0x38] sm:$0xff]
          %v1297 = vld [vmem:[#allocation2 + $0x40] sm:$0xff]
          %v1298 = vld [vmem:[#allocation2 + $0x48] sm:$0xff]
          %v1299 = vld [vmem:[#allocation2 + $0x50] sm:$0xff]
          %v1300 = vld [vmem:[#allocation2 + $0x58] sm:$0xff]
          %v1301 = vld [vmem:[#allocation2 + $0x60] sm:$0xff]
          %v1302 = vld [vmem:[#allocation2 + $0x68] sm:$0xff]
          %v1303 = vld [vmem:[#allocation2 + $0x70] sm:$0xff]
          %v1304 = vld [vmem:[#allocation2 + $0x78] sm:$0xff]
          %v1305 = vld [vmem:[#allocation2 + $0x80] sm:$0xff]
          %v1306 = vld [vmem:[#allocation2 + $0x88] sm:$0xff]
          %v1307 = vld [vmem:[#allocation2 + $0x90] sm:$0xff]
          %v1308 = vld [vmem:[#allocation2 + $0x98] sm:$0xff]
          %v1309 = vld [vmem:[#allocation2 + $0xa0] sm:$0xff]
          %v1310 = vld [vmem:[#allocation2 + $0xa8] sm:$0xff]
          %v1311 = vld [vmem:[#allocation2 + $0xb0] sm:$0xff]
          %v1312 = vld [vmem:[#allocation2 + $0xb8] sm:$0xff]
          %v1313 = vld [vmem:[#allocation2 + $0xc0] sm:$0xff]
          %v1314 = vld [vmem:[#allocation2 + $0xc8] sm:$0xff]
          %v1315 = vld [vmem:[#allocation2 + $0xd0] sm:$0xff]
          %v1316 = vld [vmem:[#allocation2 + $0xd8] sm:$0xff]
          %v1317 = vld [vmem:[#allocation2 + $0xe0] sm:$0xff]
          %v1318 = vld [vmem:[#allocation2 + $0xe8] sm:$0xff]
          %v1319 = vld [vmem:[#allocation2 + $0xf0] sm:$0xff]
          %v1320 = vld [vmem:[#allocation2 + $0xf8] sm:$0xff]
          %v1321 = vld [vmem:[#allocation2 + $0x100] sm:$0xff]
          %v1322 = vld [vmem:[#allocation2 + $0x108] sm:$0xff]
          %v1323 = vld [vmem:[#allocation2 + $0x110] sm:$0xff]
          %v1324 = vld [vmem:[#allocation2 + $0x118] sm:$0xff]
          %v1325 = vld [vmem:[#allocation2 + $0x120] sm:$0xff]
          %v1326 = vld [vmem:[#allocation2 + $0x128] sm:$0xff]
          %v1327 = vld [vmem:[#allocation2 + $0x130] sm:$0xff]
          %v1328 = vld [vmem:[#allocation2 + $0x138] sm:$0xff]
          %v1329 = vld [vmem:[#allocation2 + $0x140] sm:$0xff]
          %v1330 = vld [vmem:[#allocation2 + $0x148] sm:$0xff]
          %v1331 = vld [vmem:[#allocation2 + $0x150] sm:$0xff]
          %v1332 = vld [vmem:[#allocation2 + $0x158] sm:$0xff]
          %v1333 = vld [vmem:[#allocation2 + $0x160] sm:$0xff]
          %v1334 = vld [vmem:[#allocation2 + $0x168] sm:$0xff]
          %v1335 = vld [vmem:[#allocation2 + $0x170] sm:$0xff]
          %v1336 = vld [vmem:[#allocation2 + $0x178] sm:$0xff]
          %v1337 = vld [vmem:[#allocation2 + $0x180] sm:$0xff]
          %v1338 = vld [vmem:[#allocation2 + $0x188] sm:$0xff]
          %v1339 = vld [vmem:[#allocation2 + $0x190] sm:$0xff]
          %v1340 = vld [vmem:[#allocation2 + $0x198] sm:$0xff]
          %v1341 = vld [vmem:[#allocation2 + $0x1a0] sm:$0xff]
          %v1342 = vld [vmem:[#allocation2 + $0x1a8] sm:$0xff]
          %v1343 = vld [vmem:[#allocation2 + $0x1b0] sm:$0xff]
          %v1344 = vld [vmem:[#allocation2 + $0x1b8] sm:$0xff]
          %v1345 = vld [vmem:[#allocation2 + $0x1c0] sm:$0xff]
          %v1346 = vld [vmem:[#allocation2 + $0x1c8] sm:$0xff]
          %v1347 = vld [vmem:[#allocation2 + $0x1d0] sm:$0xff]
          %v1348 = vld [vmem:[#allocation2 + $0x1d8] sm:$0xff]
          %v1349 = vld [vmem:[#allocation2 + $0x1e0] sm:$0xff]
          %v1350 = vld [vmem:[#allocation2 + $0x1e8] sm:$0xff]
          %v1351 = vld [vmem:[#allocation2 + $0x1f0] sm:$0xff]
          %v1352 = vld [vmem:[#allocation2 + $0x1f8] sm:$0xff]
          %1353 = vst [vmem:[%s249] sm:$0xff] %v1289
          %1354 = vst [vmem:[%s249 + $0x8] sm:$0xff] %v1290
          %1355 = vst [vmem:[%s249 + $0x10] sm:$0xff] %v1291
          %1356 = vst [vmem:[%s249 + $0x18] sm:$0xff] %v1292
          %1357 = vst [vmem:[%s249 + $0x20] sm:$0xff] %v1293
          %1358 = vst [vmem:[%s249 + $0x28] sm:$0xff] %v1294
          %1359 = vst [vmem:[%s249 + $0x30] sm:$0xff] %v1295
          %1360 = vst [vmem:[%s249 + $0x38] sm:$0xff] %v1296
          %1361 = vst [vmem:[%s249 + $0x40] sm:$0xff] %v1297
          %1362 = vst [vmem:[%s249 + $0x48] sm:$0xff] %v1298
          %1363 = vst [vmem:[%s249 + $0x50] sm:$0xff] %v1299
          %1364 = vst [vmem:[%s249 + $0x58] sm:$0xff] %v1300
          %1365 = vst [vmem:[%s249 + $0x60] sm:$0xff] %v1301
          %1366 = vst [vmem:[%s249 + $0x68] sm:$0xff] %v1302
          %1367 = vst [vmem:[%s249 + $0x70] sm:$0xff] %v1303
          %1368 = vst [vmem:[%s249 + $0x78] sm:$0xff] %v1304
          %1369 = vst [vmem:[%s249 + $0x80] sm:$0xff] %v1305
          %1370 = vst [vmem:[%s249 + $0x88] sm:$0xff] %v1306
          %1371 = vst [vmem:[%s249 + $0x90] sm:$0xff] %v1307
          %1372 = vst [vmem:[%s249 + $0x98] sm:$0xff] %v1308
          %1373 = vst [vmem:[%s249 + $0xa0] sm:$0xff] %v1309
          %1374 = vst [vmem:[%s249 + $0xa8] sm:$0xff] %v1310
          %1375 = vst [vmem:[%s249 + $0xb0] sm:$0xff] %v1311
          %1376 = vst [vmem:[%s249 + $0xb8] sm:$0xff] %v1312
          %1377 = vst [vmem:[%s249 + $0xc0] sm:$0xff] %v1313
          %1378 = vst [vmem:[%s249 + $0xc8] sm:$0xff] %v1314
          %1379 = vst [vmem:[%s249 + $0xd0] sm:$0xff] %v1315
          %1380 = vst [vmem:[%s249 + $0xd8] sm:$0xff] %v1316
          %1381 = vst [vmem:[%s249 + $0xe0] sm:$0xff] %v1317
          %1382 = vst [vmem:[%s249 + $0xe8] sm:$0xff] %v1318
          %1383 = vst [vmem:[%s249 + $0xf0] sm:$0xff] %v1319
          %1384 = vst [vmem:[%s249 + $0xf8] sm:$0xff] %v1320
          %1385 = vst [vmem:[%s249 + $0x100] sm:$0xff] %v1321
          %1386 = vst [vmem:[%s249 + $0x108] sm:$0xff] %v1322
          %1387 = vst [vmem:[%s249 + $0x110] sm:$0xff] %v1323
          %1388 = vst [vmem:[%s249 + $0x118] sm:$0xff] %v1324
          %1389 = vst [vmem:[%s249 + $0x120] sm:$0xff] %v1325
          %1390 = vst [vmem:[%s249 + $0x128] sm:$0xff] %v1326
          %1391 = vst [vmem:[%s249 + $0x130] sm:$0xff] %v1327
          %1392 = vst [vmem:[%s249 + $0x138] sm:$0xff] %v1328
          %1393 = vst [vmem:[%s249 + $0x140] sm:$0xff] %v1329
          %1394 = vst [vmem:[%s249 + $0x148] sm:$0xff] %v1330
          %1395 = vst [vmem:[%s249 + $0x150] sm:$0xff] %v1331
          %1396 = vst [vmem:[%s249 + $0x158] sm:$0xff] %v1332
          %1397 = vst [vmem:[%s249 + $0x160] sm:$0xff] %v1333
          %1398 = vst [vmem:[%s249 + $0x168] sm:$0xff] %v1334
          %1399 = vst [vmem:[%s249 + $0x170] sm:$0xff] %v1335
          %1400 = vst [vmem:[%s249 + $0x178] sm:$0xff] %v1336
          %1401 = vst [vmem:[%s249 + $0x180] sm:$0xff] %v1337
          %1402 = vst [vmem:[%s249 + $0x188] sm:$0xff] %v1338
          %1403 = vst [vmem:[%s249 + $0x190] sm:$0xff] %v1339
          %1404 = vst [vmem:[%s249 + $0x198] sm:$0xff] %v1340
          %1405 = vst [vmem:[%s249 + $0x1a0] sm:$0xff] %v1341
          %1406 = vst [vmem:[%s249 + $0x1a8] sm:$0xff] %v1342
          %1407 = vst [vmem:[%s249 + $0x1b0] sm:$0xff] %v1343
          %1408 = vst [vmem:[%s249 + $0x1b8] sm:$0xff] %v1344
          %1409 = vst [vmem:[%s249 + $0x1c0] sm:$0xff] %v1345
          %1410 = vst [vmem:[%s249 + $0x1c8] sm:$0xff] %v1346
          %1411 = vst [vmem:[%s249 + $0x1d0] sm:$0xff] %v1347
          %1412 = vst [vmem:[%s249 + $0x1d8] sm:$0xff] %v1348
          %1413 = vst [vmem:[%s249 + $0x1e0] sm:$0xff] %v1349
          %1414 = vst [vmem:[%s249 + $0x1e8] sm:$0xff] %v1350
          %1415 = vst [vmem:[%s249 + $0x1f0] sm:$0xff] %v1351
          %1416 = vst [vmem:[%s249 + $0x1f8] sm:$0xff] %v1352
        $region44: #{our_sparse_matmul.1} parent=27 // pred_fallthru
          _
        %s1417 = sand.u32 %s120, 1
        %s1418 = scalar_lea.sflag [#allocation5], %s1417
        %s1419 = sand.u32 %s120, 1
        %s1420 = smul.addr %s1419, 512
        %s1421 = scalar_lea.vmem [#allocation8], %s1420
        // Predicated region
        $region45: #{our_sparse_matmul.1} parent=27 // pred_check
          %p1422 = pneg %p130
        $region46: #{our_sparse_matmul.1} parent=27 // pred_check_branch
          %1424 = sbr.rel (%p1422) target = $region48
        $region47: #{our_sparse_matmul.1} parent=27 // pred_region
          %s1425 = smul.u32 32, %s29
          %s1426 = smul.u32 2, %s30
          %s1428 = ssub.s32 8192, 8192
          %1429 = vsyncadd %s1418, %s1428
          %s1430 = smul.addr %s1425, 2
          %s1431 = sadd.s32 %s1426, %s1430
          %s1432 = smul.addr %s28, 64
          %s1433 = sadd.s32 %s1431, %s1432
          %s1434 = smul.addr %s1433, 128
          %s1435 = scalar_lea.hbm %s2, %s1434
          %s1436 = sshll.u32 %s1421, 4
          %s1437 = int_to_ptr.vmem [resolvable:$true] %s1436
          %1442 = dma.vmem_to_hbm [thread:$0]  %s1437, 8192, %s1435, %s1418, 256, 256, 16
        $region48: #{our_sparse_matmul.1} parent=27 // pred_fallthru
          _
      $region28: #{our_sparse_matmul.1} parent=5 // pred_fallthru
        _
      %p1443 = scmp.le.s32.totalorder 2, %s17
      // Predicated region
      $region49: #{our_sparse_matmul.1} parent=5 // pred_check
        %p1444 = pneg %p1443
      $region50: #{our_sparse_matmul.1} parent=5 // pred_check_branch
        %1446 = sbr.rel (%p1444) target = $region52
      $region51: #{our_sparse_matmul.1} parent=5 // pred_region
        %s1447 = ssub.s32 %s17, 2
        // Predicated region
        $region53: #{our_sparse_matmul.1} parent=51 // pred_check
          %p1448 = pneg %p136
        $region54: #{our_sparse_matmul.1} parent=51 // pred_check_branch
          %1450 = sbr.rel (%p1448) target = $region56
        $region55: #{our_sparse_matmul.1} parent=51 // pred_region
          %s1451 = sand.u32 %s121, 1
          %s1452 = scalar_lea.sflag [#allocation5], %s1451
          %s1453 = sand.u32 %s121, 1
          %s1454 = smul.addr %s1453, 512
          %s1455 = scalar_lea.vmem [#allocation8], %s1454
          %1456 = dma.done %s1452, 8192
        $region56: #{our_sparse_matmul.1} parent=51 // pred_fallthru
          _
      $region52: #{our_sparse_matmul.1} parent=5 // pred_fallthru
        _
    $region6: #{our_sparse_matmul.1} parent=1 // loop_footer
      %s21 = sadd.s32 1, %s17
    $region7: #{our_sparse_matmul.1} parent=1 // loop_footer_branch
      %16 = sbr.rel target = $region3
    $region8: #{our_sparse_matmul.1} parent=1 // loop_exit
      _
    %1457 = vsyncpa [#allocation4], 1
    %s1458 = scalar_lea.sflag [#allocation4], 1
    %1459 = vsyncpa %s1458, 1
    %1460 = vsyncpa [#allocation7], 1
    %s1461 = scalar_lea.sflag [#allocation7], 1
    %1462 = vsyncpa %s1461, 1
    %1463 = vsyncpa [#allocation5], 1
    %s1464 = scalar_lea.sflag [#allocation5], 1
    %1465 = vsyncpa %s1464, 1

</llo_original>
